<compile_context>
chip_gen: v7x
topology: tpu7x:2x2x1
jax: 0.10.0
libtpu: 0.0.40
codegen_flags: <defaults>
</compile_context>

<pallas_src>
import functools

import numpy as np
from scipy.optimize import linear_sum_assignment

import jax
import jax.numpy as jnp
from jax import lax
from jax.experimental import pallas as pl
from jax.experimental.pallas import tpu as pltpu

N_MAX = 64  # max persistence pairs per diagram.  Diagrams are padded with (0, 0);
            # this is provably harmless for the matching: for any real point
            # (b, d), max(|b|, |d|) >= |d - b| / 2, so matching a padded (0, 0)
            # point to a real point is never cheaper than sending both to the
            # diagonal — padded points always pair with zero-cost diagonal copies.


# ----------------------------------------------------------------------------- #
# Host-side cubical persistence (H0).  Sequential union-find: no Pallas equivalent.
# TODO(synk): dim-1 (H1) persistence pairs of the cubical complex are not computed
#             (requires boundary-matrix reduction); the essential H0 class is
#             paired with the global max instead of +inf as in torch_topological.
# ----------------------------------------------------------------------------- #
def cubical_ph0(img: np.ndarray) -> np.ndarray:
    """0-dim sublevel-set persistence diagram of a 2-D image, 8-connectivity."""
    H, W = img.shape
    vals = np.asarray(img, dtype=np.float64).ravel()
    order = np.argsort(vals, kind="stable")
    parent = np.full(H * W, -1, dtype=np.int64)
    birth = np.zeros(H * W, dtype=np.float64)
    pairs = []

    def find(i):
        while parent[i] != i:
            parent[i] = parent[parent[i]]
            i = parent[i]
        return i

    for idx in order:
        v = vals[idx]
        parent[idx] = idx
        birth[idx] = v
        r, c = divmod(idx, W)
        for dr in (-1, 0, 1):
            for dc in (-1, 0, 1):
                if dr == 0 and dc == 0:
                    continue
                rr, cc = r + dr, c + dc
                if 0 <= rr < H and 0 <= cc < W:
                    n = rr * W + cc
                    if parent[n] < 0:
                        continue
                    ra, rb = find(idx), find(n)
                    if ra == rb:
                        continue
                    old, young = (ra, rb) if birth[ra] <= birth[rb] else (rb, ra)
                    if v > birth[young]:  # drop zero-persistence pairs
                        pairs.append((birth[young], v))
                    parent[young] = old
    gmin, gmax = float(vals.min()), float(vals.max())
    if gmax > gmin:
        pairs.append((gmin, gmax))  # essential class (finite-death convention)
    return np.asarray(pairs, dtype=np.float32).reshape(-1, 2)


def _pad_diagram(dgm: np.ndarray, n_max: int) -> np.ndarray:
    """Pad a (k, 2) diagram to (n_max, 2) with (0, 0) rows; if k > n_max keep the
    n_max most persistent pairs (no hard assert)."""
    out = np.zeros((n_max, 2), np.float32)
    if dgm.shape[0] > n_max:
        # TODO(synk): truncation-by-persistence deviates from the exact distance
        #             when a diagram has more than N_MAX points.
        keep = np.argsort(dgm[:, 0] - dgm[:, 1])[:n_max]  # largest persistence
        dgm = dgm[keep]
    out[: dgm.shape[0]] = dgm
    return out


# ----------------------------------------------------------------------------- #
# Pallas kernel: augmented Wasserstein cost matrices for a tile of diagram pairs.
# For each pair p (rows = pred points + n diagonal copies, cols = gt points + n):
#   M[i, j] = ||pred_i - gt_j||_inf^q   (i < n, j < n)
#           = dist(pred_i, diag)^q      (i < n, j >= n)
#           = dist(gt_j, diag)^q        (i >= n, j < n)
#           = 0                         (i >= n, j >= n)
# ----------------------------------------------------------------------------- #
def _cost_kernel(packed_ref, out_ref, *, n, q, tile):
    # packed_ref: (tile, 8, 2n) — rows 0..3 = pred births, pred deaths, gt births,
    #             gt deaths (lanes >= n and rows >= 4 are zero padding).
    # out_ref:    (tile, 2n, 2n) float32.
    two_n = 2 * n
    qi = int(round(q))
    exact_int = float(qi) == float(q) and qi >= 1

    def powq(x):
        return lax.integer_pow(x, qi) if exact_int else x ** q

    # Quadrant masks of the augmented matrix — shared by all pairs in the tile,
    # hoisted out of the per-pair loop.
    row_i = lax.broadcasted_iota(jnp.int32, (two_n, two_n), 0)
    col_j = lax.broadcasted_iota(jnp.int32, (two_n, two_n), 1)
    in_r = row_i < n
    in_c = col_j < n

    def body(p, carry):
        blk = packed_ref[p]              # (8, 2n) single lane-dense load
        blk_t = jnp.transpose(blk)       # (2n, 8): column layout built in-kernel
        b1c = blk_t[:, 0:1]              # (2n, 1) pred births
        d1c = blk_t[:, 1:2]              # (2n, 1) pred deaths
        b2r = blk[2:3, :]                # (1, 2n) gt births
        d2r = blk[3:4, :]                # (1, 2n) gt deaths

        # Implicit broadcasting only — no materialized broadcast_to.
        cross = jnp.maximum(jnp.abs(b1c - b2r), jnp.abs(d1c - d2r))  # L_inf metric
        diag1 = 0.5 * jnp.abs(d1c - b1c)                             # (2n, 1)
        diag2 = 0.5 * jnp.abs(d2r - b2r)                             # (1, 2n)

        m = jnp.where(in_r & in_c, cross,
                      jnp.where(in_r, diag1,
                                jnp.where(in_c, diag2, 0.0)))
        out_ref[p] = powq(m)             # one full-width, lane-dense store
        return carry

    lax.fori_loop(0, tile, body, None, unroll=(tile <= 8))


def _choose_bc_tile(bc: int) -> int:
    """Fuse many (b, c) pairs per grid step to amortize the ~0.35 us per-step
    pipeline overhead, while keeping >= 2 grid steps so the parallel axis can be
    sharded across both TensorCores on v7x."""
    if bc <= 1:
        return 1
    return min(32, (bc + 1) // 2)


def wasserstein_cost_matrices(dgm_pred: np.ndarray, dgm_gt: np.ndarray, q):
    """dgm_pred, dgm_gt: (BC, N_MAX, 2) float32, padded with (0, 0).
    Returns (BC, 2*N_MAX, 2*N_MAX) augmented cost matrices (device array)."""
    bc, n, _ = dgm_pred.shape
    two_n = 2 * n
    assert two_n >= 128 and two_n % 128 == 0, "2*N_MAX must be a multiple of 128"

    tile = _choose_bc_tile(bc)
    n_steps = (bc + tile - 1) // tile
    bc_pad = tile * n_steps

    # One lane-dense (8, 2n) block per pair: a single aligned DMA per BC tile
    # instead of four sub-lane-width DMAs per pair.
    packed = np.zeros((bc_pad, 8, two_n), np.float32)
    packed[:bc, 0, :n] = dgm_pred[:, :, 0]
    packed[:bc, 1, :n] = dgm_pred[:, :, 1]
    packed[:bc, 2, :n] = dgm_gt[:, :, 0]
    packed[:bc, 3, :n] = dgm_gt[:, :, 1]

    # VMEM per grid step (double-buffered in+out): ~2 * tile * (4 + 64) KiB,
    # <= ~4.3 MiB for tile <= 32 — well inside the 32 MiB scoped default on
    # v5e / v6e / v7x, so no vmem_limit_bytes override is needed.
    out = pl.pallas_call(
        functools.partial(_cost_kernel, n=n, q=float(q), tile=tile),
        out_shape=jax.ShapeDtypeStruct((bc_pad, two_n, two_n), jnp.float32),
        grid=(n_steps,),
        in_specs=[pl.BlockSpec((tile, 8, two_n), lambda i: (i, 0, 0))],
        out_specs=pl.BlockSpec((tile, two_n, two_n), lambda i: (i, 0, 0)),
        compiler_params=pltpu.CompilerParams(
            dimension_semantics=("parallel",)),
    )(jnp.asarray(packed))
    return out[:bc]


# ----------------------------------------------------------------------------- #
# Full Topological_loss forward.
# ----------------------------------------------------------------------------- #
def topological_loss(pred, gt, topo_loss_q=2, topo_lambda=0.1):
    B, C, H, W = pred.shape
    assert gt.shape == pred.shape
    pred_np = np.asarray(pred)
    gt_np = np.asarray(gt)

    bc = B * C
    dgm_p = np.zeros((bc, N_MAX, 2), np.float32)
    dgm_g = np.zeros((bc, N_MAX, 2), np.float32)
    for b in range(B):
        for c in range(C):
            dgm_p[b * C + c] = _pad_diagram(cubical_ph0(pred_np[b, c]), N_MAX)
            dgm_g[b * C + c] = _pad_diagram(cubical_ph0(gt_np[b, c]), N_MAX)

    # Hot path on TPU: augmented cost matrices (pairwise L_inf, diagonal dists, ^q).
    M = wasserstein_cost_matrices(dgm_p, dgm_g, topo_loss_q)
    M = np.asarray(jax.block_until_ready(M))

    # TODO(synk): the exact optimal matching of the Wasserstein distance is a
    #             combinatorial assignment problem (no Pallas equivalent) — host.
    costs = np.zeros(bc, dtype=np.float64)
    for i in range(bc):
        r, c = linear_sum_assignment(M[i])
        costs[i] = M[i][r, c].sum()

    # torch_topological.WassersteinDistance accumulates the per-diagram
    # (per-channel) matching costs of one batch element and applies a single
    # ^(1/q) root; forward() then means over the batch and scales by lambda.
    per_batch = costs.reshape(B, C).sum(axis=1) ** (1.0 / topo_loss_q)
    loss = topo_lambda * per_batch.mean()
    return jnp.asarray(loss, dtype=jnp.float32)


if __name__ == "__main__":
    key = jax.random.PRNGKey(0)
    k1, k2 = jax.random.split(key)
    # Small shapes consistent with the module: (B, C, H, W) = (2, 4, 16, 16)
    pred = jax.nn.sigmoid(jax.random.normal(k1, (2, 4, 16, 16), dtype=jnp.float32))
    gt = jax.random.uniform(k2, (2, 4, 16, 16), dtype=jnp.float32)

    loss = topological_loss(pred, gt, topo_loss_q=2, topo_lambda=0.1)
    loss = jax.block_until_ready(loss)
    assert np.isfinite(float(loss))
    print("KERNEL_OK")
</pallas_src>

<mosaic_0001>
module attributes {stable_mosaic.version = 11 : i64} {
  func.func @_cost_kernel(%arg0: i32, %arg1: memref<4x8x128xf32, #tpu.memory_space<vmem>>, %arg2: memref<4x128x128xf32, #tpu.memory_space<vmem>>) attributes {dimension_semantics = [#tpu.dimension_semantics<parallel>], iteration_bounds = array<i64: 2>, scalar_prefetch = 0 : i64, scratch_operands = 0 : i64, tpu.core_type = #tpu.core_type<tc>, window_params = [{transform_indices = @transform_0, window_bounds = array<i64: 4, 8, 128>}, {transform_indices = @transform_1, window_bounds = array<i64: 4, 128, 128>}]} {
    %0 = tpu.iota {dimensions = array<i32: 0>} : vector<128x128xi32>
    %1 = tpu.iota {dimensions = array<i32: 1>} : vector<128x128xi32>
    %c64_i32 = arith.constant 64 : i32
    %2 = vector.broadcast %c64_i32 : i32 to vector<128x128xi32>
    %3 = arith.cmpi slt, %0, %2 : vector<128x128xi32>
    %c64_i32_0 = arith.constant 64 : i32
    %4 = vector.broadcast %c64_i32_0 : i32 to vector<128x128xi32>
    %5 = arith.cmpi slt, %1, %4 : vector<128x128xi32>
    %c0_i32 = arith.constant 0 : i32
    %6 = arith.index_cast %c0_i32 : i32 to index
    %c0 = arith.constant 0 : index
    %c0_1 = arith.constant 0 : index
    %7 = vector.load %arg1[%6, %c0, %c0_1] : memref<4x8x128xf32, #tpu.memory_space<vmem>>, vector<1x8x128xf32>
    %8 = vector.shape_cast %7 : vector<1x8x128xf32> to vector<8x128xf32>
    %9 = tpu.transpose %8, [1, 0] : vector<8x128xf32> -> vector<128x8xf32>
    %10 = vector.extract_strided_slice %9 {offsets = [0, 0], sizes = [128, 1], strides = [1, 1]} : vector<128x8xf32> to vector<128x1xf32>
    %11 = vector.extract_strided_slice %9 {offsets = [0, 1], sizes = [128, 1], strides = [1, 1]} : vector<128x8xf32> to vector<128x1xf32>
    %12 = vector.extract_strided_slice %8 {offsets = [2, 0], sizes = [1, 128], strides = [1, 1]} : vector<8x128xf32> to vector<1x128xf32>
    %13 = vector.extract_strided_slice %8 {offsets = [3, 0], sizes = [1, 128], strides = [1, 1]} : vector<8x128xf32> to vector<1x128xf32>
    %14 = vector.broadcast %10 : vector<128x1xf32> to vector<128x128xf32>
    %15 = vector.broadcast %12 : vector<1x128xf32> to vector<128x128xf32>
    %16 = arith.subf %14, %15 : vector<128x128xf32>
    %17 = math.absf %16 : vector<128x128xf32>
    %18 = vector.broadcast %11 : vector<128x1xf32> to vector<128x128xf32>
    %19 = vector.broadcast %13 : vector<1x128xf32> to vector<128x128xf32>
    %20 = arith.subf %18, %19 : vector<128x128xf32>
    %21 = math.absf %20 : vector<128x128xf32>
    %22 = arith.maximumf %17, %21 : vector<128x128xf32>
    %23 = arith.subf %11, %10 : vector<128x1xf32>
    %24 = math.absf %23 : vector<128x1xf32>
    %cst = arith.constant 5.000000e-01 : f32
    %25 = vector.broadcast %cst : f32 to vector<128x1xf32>
    %26 = arith.mulf %25, %24 : vector<128x1xf32>
    %27 = arith.subf %13, %12 : vector<1x128xf32>
    %28 = math.absf %27 : vector<1x128xf32>
    %cst_2 = arith.constant 5.000000e-01 : f32
    %29 = vector.broadcast %cst_2 : f32 to vector<1x128xf32>
    %30 = arith.mulf %29, %28 : vector<1x128xf32>
    %31 = arith.andi %3, %5 : vector<128x128xi1>
    %cst_3 = arith.constant 0.000000e+00 : f32
    %32 = vector.shape_cast %30 : vector<1x128xf32> to vector<1x128xf32>
    %33 = vector.broadcast %32 : vector<1x128xf32> to vector<128x128xf32>
    %34 = vector.broadcast %cst_3 : f32 to vector<128x128xf32>
    %35 = arith.select %5, %33, %34 : vector<128x128xi1>, vector<128x128xf32>
    %36 = vector.shape_cast %26 : vector<128x1xf32> to vector<128x1xf32>
    %37 = vector.broadcast %36 : vector<128x1xf32> to vector<128x128xf32>
    %38 = arith.select %3, %37, %35 : vector<128x128xi1>, vector<128x128xf32>
    %39 = arith.select %31, %22, %38 : vector<128x128xi1>, vector<128x128xf32>
    %40 = arith.mulf %39, %39 : vector<128x128xf32>
    %41 = arith.index_cast %c0_i32 : i32 to index
    %c0_4 = arith.constant 0 : index
    %c0_5 = arith.constant 0 : index
    %42 = vector.load %arg2[%41, %c0_4, %c0_5] : memref<4x128x128xf32, #tpu.memory_space<vmem>>, vector<1x128x128xf32>
    %43 = vector.shape_cast %42 : vector<1x128x128xf32> to vector<128x128xf32>
    %44 = vector.shape_cast %40 : vector<128x128xf32> to vector<1x128x128xf32>
    tpu.vector_store %arg2[%41, %c0_4, %c0_5], %44 {strides = array<i32>} : memref<4x128x128xf32, #tpu.memory_space<vmem>>, vector<1x128x128xf32>,
    %c1_i32 = arith.constant 1 : i32
    %45 = arith.index_cast %c1_i32 : i32 to index
    %c0_6 = arith.constant 0 : index
    %c0_7 = arith.constant 0 : index
    %46 = vector.load %arg1[%45, %c0_6, %c0_7] : memref<4x8x128xf32, #tpu.memory_space<vmem>>, vector<1x8x128xf32>
    %47 = vector.shape_cast %46 : vector<1x8x128xf32> to vector<8x128xf32>
    %48 = tpu.transpose %47, [1, 0] : vector<8x128xf32> -> vector<128x8xf32>
    %49 = vector.extract_strided_slice %48 {offsets = [0, 0], sizes = [128, 1], strides = [1, 1]} : vector<128x8xf32> to vector<128x1xf32>
    %50 = vector.extract_strided_slice %48 {offsets = [0, 1], sizes = [128, 1], strides = [1, 1]} : vector<128x8xf32> to vector<128x1xf32>
    %51 = vector.extract_strided_slice %47 {offsets = [2, 0], sizes = [1, 128], strides = [1, 1]} : vector<8x128xf32> to vector<1x128xf32>
    %52 = vector.extract_strided_slice %47 {offsets = [3, 0], sizes = [1, 128], strides = [1, 1]} : vector<8x128xf32> to vector<1x128xf32>
    %53 = vector.broadcast %49 : vector<128x1xf32> to vector<128x128xf32>
    %54 = vector.broadcast %51 : vector<1x128xf32> to vector<128x128xf32>
    %55 = arith.subf %53, %54 : vector<128x128xf32>
    %56 = math.absf %55 : vector<128x128xf32>
    %57 = vector.broadcast %50 : vector<128x1xf32> to vector<128x128xf32>
    %58 = vector.broadcast %52 : vector<1x128xf32> to vector<128x128xf32>
    %59 = arith.subf %57, %58 : vector<128x128xf32>
    %60 = math.absf %59 : vector<128x128xf32>
    %61 = arith.maximumf %56, %60 : vector<128x128xf32>
    %62 = arith.subf %50, %49 : vector<128x1xf32>
    %63 = math.absf %62 : vector<128x1xf32>
    %cst_8 = arith.constant 5.000000e-01 : f32
    %64 = vector.broadcast %cst_8 : f32 to vector<128x1xf32>
    %65 = arith.mulf %64, %63 : vector<128x1xf32>
    %66 = arith.subf %52, %51 : vector<1x128xf32>
    %67 = math.absf %66 : vector<1x128xf32>
    %cst_9 = arith.constant 5.000000e-01 : f32
    %68 = vector.broadcast %cst_9 : f32 to vector<1x128xf32>
    %69 = arith.mulf %68, %67 : vector<1x128xf32>
    %70 = arith.andi %3, %5 : vector<128x128xi1>
    %cst_10 = arith.constant 0.000000e+00 : f32
    %71 = vector.shape_cast %69 : vector<1x128xf32> to vector<1x128xf32>
    %72 = vector.broadcast %71 : vector<1x128xf32> to vector<128x128xf32>
    %73 = vector.broadcast %cst_10 : f32 to vector<128x128xf32>
    %74 = arith.select %5, %72, %73 : vector<128x128xi1>, vector<128x128xf32>
    %75 = vector.shape_cast %65 : vector<128x1xf32> to vector<128x1xf32>
    %76 = vector.broadcast %75 : vector<128x1xf32> to vector<128x128xf32>
    %77 = arith.select %3, %76, %74 : vector<128x128xi1>, vector<128x128xf32>
    %78 = arith.select %70, %61, %77 : vector<128x128xi1>, vector<128x128xf32>
    %79 = arith.mulf %78, %78 : vector<128x128xf32>
    %80 = arith.index_cast %c1_i32 : i32 to index
    %c0_11 = arith.constant 0 : index
    %c0_12 = arith.constant 0 : index
    %81 = vector.load %arg2[%80, %c0_11, %c0_12] : memref<4x128x128xf32, #tpu.memory_space<vmem>>, vector<1x128x128xf32>
    %82 = vector.shape_cast %81 : vector<1x128x128xf32> to vector<128x128xf32>
    %83 = vector.shape_cast %79 : vector<128x128xf32> to vector<1x128x128xf32>
    tpu.vector_store %arg2[%80, %c0_11, %c0_12], %83 {strides = array<i32>} : memref<4x128x128xf32, #tpu.memory_space<vmem>>, vector<1x128x128xf32>,
    %c2_i32 = arith.constant 2 : i32
    %84 = arith.index_cast %c2_i32 : i32 to index
    %c0_13 = arith.constant 0 : index
    %c0_14 = arith.constant 0 : index
    %85 = vector.load %arg1[%84, %c0_13, %c0_14] : memref<4x8x128xf32, #tpu.memory_space<vmem>>, vector<1x8x128xf32>
    %86 = vector.shape_cast %85 : vector<1x8x128xf32> to vector<8x128xf32>
    %87 = tpu.transpose %86, [1, 0] : vector<8x128xf32> -> vector<128x8xf32>
    %88 = vector.extract_strided_slice %87 {offsets = [0, 0], sizes = [128, 1], strides = [1, 1]} : vector<128x8xf32> to vector<128x1xf32>
    %89 = vector.extract_strided_slice %87 {offsets = [0, 1], sizes = [128, 1], strides = [1, 1]} : vector<128x8xf32> to vector<128x1xf32>
    %90 = vector.extract_strided_slice %86 {offsets = [2, 0], sizes = [1, 128], strides = [1, 1]} : vector<8x128xf32> to vector<1x128xf32>
    %91 = vector.extract_strided_slice %86 {offsets = [3, 0], sizes = [1, 128], strides = [1, 1]} : vector<8x128xf32> to vector<1x128xf32>
    %92 = vector.broadcast %88 : vector<128x1xf32> to vector<128x128xf32>
    %93 = vector.broadcast %90 : vector<1x128xf32> to vector<128x128xf32>
    %94 = arith.subf %92, %93 : vector<128x128xf32>
    %95 = math.absf %94 : vector<128x128xf32>
    %96 = vector.broadcast %89 : vector<128x1xf32> to vector<128x128xf32>
    %97 = vector.broadcast %91 : vector<1x128xf32> to vector<128x128xf32>
    %98 = arith.subf %96, %97 : vector<128x128xf32>
    %99 = math.absf %98 : vector<128x128xf32>
    %100 = arith.maximumf %95, %99 : vector<128x128xf32>
    %101 = arith.subf %89, %88 : vector<128x1xf32>
    %102 = math.absf %101 : vector<128x1xf32>
    %cst_15 = arith.constant 5.000000e-01 : f32
    %103 = vector.broadcast %cst_15 : f32 to vector<128x1xf32>
    %104 = arith.mulf %103, %102 : vector<128x1xf32>
    %105 = arith.subf %91, %90 : vector<1x128xf32>
    %106 = math.absf %105 : vector<1x128xf32>
    %cst_16 = arith.constant 5.000000e-01 : f32
    %107 = vector.broadcast %cst_16 : f32 to vector<1x128xf32>
    %108 = arith.mulf %107, %106 : vector<1x128xf32>
    %109 = arith.andi %3, %5 : vector<128x128xi1>
    %cst_17 = arith.constant 0.000000e+00 : f32
    %110 = vector.shape_cast %108 : vector<1x128xf32> to vector<1x128xf32>
    %111 = vector.broadcast %110 : vector<1x128xf32> to vector<128x128xf32>
    %112 = vector.broadcast %cst_17 : f32 to vector<128x128xf32>
    %113 = arith.select %5, %111, %112 : vector<128x128xi1>, vector<128x128xf32>
    %114 = vector.shape_cast %104 : vector<128x1xf32> to vector<128x1xf32>
    %115 = vector.broadcast %114 : vector<128x1xf32> to vector<128x128xf32>
    %116 = arith.select %3, %115, %113 : vector<128x128xi1>, vector<128x128xf32>
    %117 = arith.select %109, %100, %116 : vector<128x128xi1>, vector<128x128xf32>
    %118 = arith.mulf %117, %117 : vector<128x128xf32>
    %119 = arith.index_cast %c2_i32 : i32 to index
    %c0_18 = arith.constant 0 : index
    %c0_19 = arith.constant 0 : index
    %120 = vector.load %arg2[%119, %c0_18, %c0_19] : memref<4x128x128xf32, #tpu.memory_space<vmem>>, vector<1x128x128xf32>
    %121 = vector.shape_cast %120 : vector<1x128x128xf32> to vector<128x128xf32>
    %122 = vector.shape_cast %118 : vector<128x128xf32> to vector<1x128x128xf32>
    tpu.vector_store %arg2[%119, %c0_18, %c0_19], %122 {strides = array<i32>} : memref<4x128x128xf32, #tpu.memory_space<vmem>>, vector<1x128x128xf32>,
    %c3_i32 = arith.constant 3 : i32
    %123 = arith.index_cast %c3_i32 : i32 to index
    %c0_20 = arith.constant 0 : index
    %c0_21 = arith.constant 0 : index
    %124 = vector.load %arg1[%123, %c0_20, %c0_21] : memref<4x8x128xf32, #tpu.memory_space<vmem>>, vector<1x8x128xf32>
    %125 = vector.shape_cast %124 : vector<1x8x128xf32> to vector<8x128xf32>
    %126 = tpu.transpose %125, [1, 0] : vector<8x128xf32> -> vector<128x8xf32>
    %127 = vector.extract_strided_slice %126 {offsets = [0, 0], sizes = [128, 1], strides = [1, 1]} : vector<128x8xf32> to vector<128x1xf32>
    %128 = vector.extract_strided_slice %126 {offsets = [0, 1], sizes = [128, 1], strides = [1, 1]} : vector<128x8xf32> to vector<128x1xf32>
    %129 = vector.extract_strided_slice %125 {offsets = [2, 0], sizes = [1, 128], strides = [1, 1]} : vector<8x128xf32> to vector<1x128xf32>
    %130 = vector.extract_strided_slice %125 {offsets = [3, 0], sizes = [1, 128], strides = [1, 1]} : vector<8x128xf32> to vector<1x128xf32>
    %131 = vector.broadcast %127 : vector<128x1xf32> to vector<128x128xf32>
    %132 = vector.broadcast %129 : vector<1x128xf32> to vector<128x128xf32>
    %133 = arith.subf %131, %132 : vector<128x128xf32>
    %134 = math.absf %133 : vector<128x128xf32>
    %135 = vector.broadcast %128 : vector<128x1xf32> to vector<128x128xf32>
    %136 = vector.broadcast %130 : vector<1x128xf32> to vector<128x128xf32>
    %137 = arith.subf %135, %136 : vector<128x128xf32>
    %138 = math.absf %137 : vector<128x128xf32>
    %139 = arith.maximumf %134, %138 : vector<128x128xf32>
    %140 = arith.subf %128, %127 : vector<128x1xf32>
    %141 = math.absf %140 : vector<128x1xf32>
    %cst_22 = arith.constant 5.000000e-01 : f32
    %142 = vector.broadcast %cst_22 : f32 to vector<128x1xf32>
    %143 = arith.mulf %142, %141 : vector<128x1xf32>
    %144 = arith.subf %130, %129 : vector<1x128xf32>
    %145 = math.absf %144 : vector<1x128xf32>
    %cst_23 = arith.constant 5.000000e-01 : f32
    %146 = vector.broadcast %cst_23 : f32 to vector<1x128xf32>
    %147 = arith.mulf %146, %145 : vector<1x128xf32>
    %148 = arith.andi %3, %5 : vector<128x128xi1>
    %cst_24 = arith.constant 0.000000e+00 : f32
    %149 = vector.shape_cast %147 : vector<1x128xf32> to vector<1x128xf32>
    %150 = vector.broadcast %149 : vector<1x128xf32> to vector<128x128xf32>
    %151 = vector.broadcast %cst_24 : f32 to vector<128x128xf32>
    %152 = arith.select %5, %150, %151 : vector<128x128xi1>, vector<128x128xf32>
    %153 = vector.shape_cast %143 : vector<128x1xf32> to vector<128x1xf32>
    %154 = vector.broadcast %153 : vector<128x1xf32> to vector<128x128xf32>
    %155 = arith.select %3, %154, %152 : vector<128x128xi1>, vector<128x128xf32>
    %156 = arith.select %148, %139, %155 : vector<128x128xi1>, vector<128x128xf32>
    %157 = arith.mulf %156, %156 : vector<128x128xf32>
    %158 = arith.index_cast %c3_i32 : i32 to index
    %c0_25 = arith.constant 0 : index
    %c0_26 = arith.constant 0 : index
    %159 = vector.load %arg2[%158, %c0_25, %c0_26] : memref<4x128x128xf32, #tpu.memory_space<vmem>>, vector<1x128x128xf32>
    %160 = vector.shape_cast %159 : vector<1x128x128xf32> to vector<128x128xf32>
    %161 = vector.shape_cast %157 : vector<128x128xf32> to vector<1x128x128xf32>
    tpu.vector_store %arg2[%158, %c0_25, %c0_26], %161 {strides = array<i32>} : memref<4x128x128xf32, #tpu.memory_space<vmem>>, vector<1x128x128xf32>,
    %c4_i32 = arith.constant 4 : i32
    return
  }
  func.func @transform_0(%arg0: i32) -> (i32, i32, i32) {
    %c0_i32 = arith.constant 0 : i32
    %c0_i32_0 = arith.constant 0 : i32
    %c0_i32_1 = arith.constant 0 : i32
    return %arg0, %c0_i32, %c0_i32_0 : i32, i32, i32
  }
  func.func @transform_1(%arg0: i32) -> (i32, i32, i32) {
    %c0_i32 = arith.constant 0 : i32
    %c0_i32_0 = arith.constant 0 : i32
    %c0_i32_1 = arith.constant 0 : i32
    return %arg0, %c0_i32, %c0_i32_0 : i32, i32, i32
  }
}

</mosaic_0001>

<llo_original>
// kernel: tpu_custom_call.1
$region0: #{tpu_custom_call.1}
  #allocation0 [shape = 'u32[]', space=smem, size = 0x4, offset = 0x4, fixed_abs, tag = 'smem constant byte address 0x4 - core index']
  #allocation1 [shape = 'u32[144,128]{1,0:T(1,128)}', space=vmem, size = 0x12000, scoped, tag = 'internal scratch']
  %s0 = inlined_call_operand.hbm [shape: f32[8,8,128], index: 0, kind: input, shape index: {}]
  %s1 = inlined_call_operand.hbm [shape: f32[8,128,128], index: 1, kind: output, shape index: {}]
  %s2 = sld [smem:[#allocation0]]
  $region41: #{tpu_custom_call.1} parent=0
    _
  %s4 = ssub.s32 1, %s2
  %s5 = scalar_select 0, %s4, %s2
  $region1: #{tpu_custom_call.1} parent=0
    #allocation2 [shape = 'u8[32768]{0}', space=vmem, size = 0x8000, scoped, tag = 'input window, operand 0']
    #allocation3 [shape = 's32[2]{0}', space=sflag, size = 0x8, scoped, tag = 'scoped memory for tpu_custom_call.1']
    #allocation4 [shape = 's32[2]{0}', space=sflag, size = 0x8, scoped, tag = 'scoped memory for tpu_custom_call.1']
    #allocation5 [shape = 'u8[524288]{0}', space=vmem, size = 0x80000, scoped, tag = 'output window, operand 0']
    %6 = vsyncpa [#allocation3], 0
    %s7 = scalar_lea.sflag [#allocation3], 1
    %8 = vsyncpa %s7, 0
    %9 = vsyncpa [#allocation4], 0
    %s10 = scalar_lea.sflag [#allocation4], 1
    %11 = vsyncpa %s10, 0
    loop: start=0, step=1, limit=4
    $region2: #{tpu_custom_call.1} parent=1 // loop_pre_header
      _
    $region3: #{tpu_custom_call.1} parent=1 // loop_header
      %s13 = sphi 0, %s17
      %p14 = scmp.ge.s32.totalorder %s13, 4
      %s23 = sphi 0, %s25
      %s26 = sphi 0, %s23
      %s27 = sphi 0, %s26
      %s43 = sphi 0, %s27
      %s49 = sphi 0, %s51
      %s52 = sphi 0, %s49
      %s53 = sphi 0, %s52
      %s69 = sphi 0, %s53
    $region4: #{tpu_custom_call.1} parent=1 // loop_header_branch
      %16 = sbr.rel (%p14) target = $region8
    $region5: #{tpu_custom_call.1} parent=1 // loop_body
      %s18 = ssub.s32 %s13, 1
      %s19 = ssub.s32 %s13, 2
      %s20 = sadd.s32 %s13, 1
      %s21 = ssub.s32 %s13, %s20
      %p22 = scmp.eq.s32.totalorder %s21, 0
      %s24 = sadd.s32 %s23, 1
      %s25 = scalar_select %p22, %s23, %s24
      %p28 = pneg %p22
      %p29 = scmp.eq.s32.totalorder %s13, 1
      %p30 = por %p28, %p29
      %p31 = scmp.ne.s32.totalorder %s23, %s26
      %p32 = scmp.eq.s32.totalorder %s13, 0
      %p33 = por %p31, %p32
      %p34 = scmp.ne.s32.totalorder %s23, %s26
      %p35 = scmp.eq.s32.totalorder %s18, 1
      %p36 = por %p34, %p35
      %p37 = scmp.ne.s32.totalorder %s26, %s27
      %p38 = scmp.eq.s32.totalorder %s18, 0
      %p39 = por %p37, %p38
      %p40 = scmp.ne.s32.totalorder %s26, %s27
      %p41 = scmp.eq.s32.totalorder %s19, 1
      %p42 = por %p40, %p41
      %p44 = scmp.ne.s32.totalorder %s27, %s43
      %p45 = scmp.eq.s32.totalorder %s19, 0
      %p46 = por %p44, %p45
      %s47 = ssub.s32 %s13, %s20
      %p48 = scmp.eq.s32.totalorder %s47, 0
      %s50 = sadd.s32 %s49, 1
      %s51 = scalar_select %p48, %s49, %s50
      %p54 = pneg %p48
      %p55 = scmp.eq.s32.totalorder %s13, 1
      %p56 = por %p54, %p55
      %p57 = scmp.ne.s32.totalorder %s49, %s52
      %p58 = scmp.eq.s32.totalorder %s13, 0
      %p59 = por %p57, %p58
      %p60 = scmp.ne.s32.totalorder %s49, %s52
      %p61 = scmp.eq.s32.totalorder %s18, 1
      %p62 = por %p60, %p61
      %p63 = scmp.ne.s32.totalorder %s52, %s53
      %p64 = scmp.eq.s32.totalorder %s18, 0
      %p65 = por %p63, %p64
      %p66 = scmp.ne.s32.totalorder %s52, %s53
      %p67 = scmp.eq.s32.totalorder %s19, 1
      %p68 = por %p66, %p67
      %p70 = scmp.ne.s32.totalorder %s53, %s69
      %p71 = scmp.eq.s32.totalorder %s19, 0
      %p72 = por %p70, %p71
      %p73 = scmp.le.s32.totalorder 1, %s13
      %p74 = scmp.lt.s32.totalorder %s13, 3
      %p75 = pnand %p73, %p74
      %p76 = pneg %p75
      // Predicated region
      $region9: #{tpu_custom_call.1} parent=5 // pred_check
        _
      $region10: #{tpu_custom_call.1} parent=5 // pred_check_branch
        %78 = sbr.rel (%p75) target = $region12
      $region11: #{tpu_custom_call.1} parent=5 // pred_region
        %s79 = ssub.s32 %s13, 1
      $region12: #{tpu_custom_call.1} parent=5 // pred_fallthru
        _
      %p80 = scmp.lt.s32.totalorder %s13, 2
      // Predicated region
      $region13: #{tpu_custom_call.1} parent=5 // pred_check
        %p81 = pneg %p80
      $region14: #{tpu_custom_call.1} parent=5 // pred_check_branch
        %83 = sbr.rel (%p81) target = $region16
      $region15: #{tpu_custom_call.1} parent=5 // pred_region
        // Predicated region
        $region17: #{tpu_custom_call.1} parent=15 // pred_check
          %p84 = pneg %p33
        $region18: #{tpu_custom_call.1} parent=15 // pred_check_branch
          %86 = sbr.rel (%p84) target = $region20
        $region19: #{tpu_custom_call.1} parent=15 // pred_region
          %s87 = sand.u32 %s23, 1
          %s88 = scalar_lea.sflag [#allocation3], %s87
          %s89 = sand.u32 %s23, 1
          %s90 = smul.addr %s89, 32
          %s91 = scalar_lea.vmem [#allocation2], %s90
          %s92 = smul.u32 4, %s13
          %s94 = ssub.s32 512, 512
          %95 = vsyncadd %s88, %s94
          %s96 = smul.addr %s92, 128
          %s97 = scalar_lea.hbm %s0, %s96
          %s98 = sshll.u32 %s91, 4
          %s99 = int_to_ptr.vmem [resolvable:$true] %s98
          %104 = dma.hbm_to_vmem [thread:$0]  %s97, 512, %s99, %s88, 128, 128, 8
        $region20: #{tpu_custom_call.1} parent=15 // pred_fallthru
          _
      $region16: #{tpu_custom_call.1} parent=5 // pred_fallthru
        _
      %p105 = scmp.le.s32.totalorder 1, %s13
      %p106 = scmp.lt.s32.totalorder %s13, 3
      %p107 = pnand %p105, %p106
      %p108 = pneg %p107
      // Predicated region
      $region21: #{tpu_custom_call.1} parent=5 // pred_check
        _
      $region22: #{tpu_custom_call.1} parent=5 // pred_check_branch
        %110 = sbr.rel (%p107) target = $region24
      $region23: #{tpu_custom_call.1} parent=5 // pred_region
        %s111 = ssub.s32 %s13, 1
        %s112 = sand.u32 %s26, 1
        %s113 = scalar_lea.sflag [#allocation3], %s112
        %s114 = sand.u32 %s26, 1
        %s115 = smul.addr %s114, 32
        %s116 = scalar_lea.vmem [#allocation2], %s115
        // Predicated region
        $region25: #{tpu_custom_call.1} parent=23 // pred_check
          %p117 = pneg %p39
        $region26: #{tpu_custom_call.1} parent=23 // pred_check_branch
          %119 = sbr.rel (%p117) target = $region28
        $region27: #{tpu_custom_call.1} parent=23 // pred_region
          %120 = dma.done %s113, 512
        $region28: #{tpu_custom_call.1} parent=23 // pred_fallthru
          _
        %s121 = sand.u32 %s26, 1
        %s122 = scalar_lea.sflag [#allocation3], %s121
        %s123 = sand.u32 %s26, 1
        %s124 = smul.addr %s123, 32
        %s125 = scalar_lea.vmem [#allocation2], %s124
        %p126 = pneg %p39
        %p127 = pneg %p36
        %p128 = pneg %p65
        %p129 = pneg %p62
        %s130 = sand.u32 %s52, 1
        %s131 = scalar_lea.sflag [#allocation4], %s130
        %s132 = sand.u32 %s52, 1
        %s133 = smul.addr %s132, 512
        %s134 = scalar_lea.vmem [#allocation5], %s133
        %s135 = smul.u32 4, %s18
        %s136 = smul.u32 4, %s18
        %v137 = vlaneseq
        %v138 = vshrl.u32 %v137, 7
        %v139 = vadd.s32 %v138, 8
        %v140 = vadd.s32 %v138, 16
        %v141 = vadd.s32 %v138, 24
        %v142 = vadd.s32 %v138, 32
        %v143 = vadd.s32 %v138, 40
        %v144 = vadd.s32 %v138, 48
        %v145 = vadd.s32 %v138, 56
        %v146 = vadd.s32 %v138, 64
        %v147 = vadd.s32 %v138, 72
        %v148 = vadd.s32 %v138, 80
        %v149 = vadd.s32 %v138, 88
        %v150 = vadd.s32 %v138, 96
        %v151 = vadd.s32 %v138, 104
        %v152 = vadd.s32 %v138, 112
        %v153 = vadd.s32 %v138, 120
        %v154 = vlaneseq
        %v155 = vand.u32 %v154, 127
        %vm156 = vcmp.lt.s32.totalorder %v138, 64
        %vm157 = vcmp.lt.s32.totalorder %v139, 64
        %vm158 = vcmp.lt.s32.totalorder %v140, 64
        %vm159 = vcmp.lt.s32.totalorder %v141, 64
        %vm160 = vcmp.lt.s32.totalorder %v142, 64
        %vm161 = vcmp.lt.s32.totalorder %v143, 64
        %vm162 = vcmp.lt.s32.totalorder %v144, 64
        %vm163 = vcmp.lt.s32.totalorder %v145, 64
        %vm164 = vcmp.lt.s32.totalorder %v146, 64
        %vm165 = vcmp.lt.s32.totalorder %v147, 64
        %vm166 = vcmp.lt.s32.totalorder %v148, 64
        %vm167 = vcmp.lt.s32.totalorder %v149, 64
        %vm168 = vcmp.lt.s32.totalorder %v150, 64
        %vm169 = vcmp.lt.s32.totalorder %v151, 64
        %vm170 = vcmp.lt.s32.totalorder %v152, 64
        %vm171 = vcmp.lt.s32.totalorder %v153, 64
        %vm172 = vcmp.lt.s32.totalorder %v155, 64
        %v173 = vld [vmem:[%s116] sm:$0xff]
        %174 = vxpose.xlu0.b32.start [1/16] %v173, 128
        %175 = vxpose.xlu0.b32.cont [2/16] 0.0, 128
        %176 = vxpose.xlu0.b32.cont [3/16] 0.0, 128
        %177 = vxpose.xlu0.b32.cont [4/16] 0.0, 128
        %178 = vxpose.xlu0.b32.cont [5/16] 0.0, 128
        %179 = vxpose.xlu0.b32.cont [6/16] 0.0, 128
        %180 = vxpose.xlu0.b32.cont [7/16] 0.0, 128
        %181 = vxpose.xlu0.b32.cont [8/16] 0.0, 128
        %182 = vxpose.xlu0.b32.cont [9/16] 0.0, 128
        %183 = vxpose.xlu0.b32.cont [10/16] 0.0, 128
        %184 = vxpose.xlu0.b32.cont [11/16] 0.0, 128
        %185 = vxpose.xlu0.b32.cont [12/16] 0.0, 128
        %186 = vxpose.xlu0.b32.cont [13/16] 0.0, 128
        %187 = vxpose.xlu0.b32.cont [14/16] 0.0, 128
        %188 = vxpose.xlu0.b32.cont [15/16] 0.0, 128
        %189 = vxpose.xlu0.b32.end [16/16] 0.0, 128
        %v190 = vpop.trf.xlu0
        %v191 = vpop.trf.xlu0
        %v192 = vpop.trf.xlu0
        %v193 = vpop.trf.xlu0
        %v194 = vpop.trf.xlu0
        %v195 = vpop.trf.xlu0
        %v196 = vpop.trf.xlu0
        %v197 = vpop.trf.xlu0
        %v198 = vpop.trf.xlu0
        %v199 = vpop.trf.xlu0
        %v200 = vpop.trf.xlu0
        %v201 = vpop.trf.xlu0
        %v202 = vpop.trf.xlu0
        %v203 = vpop.trf.xlu0
        %v204 = vpop.trf.xlu0
        %v205 = vpop.trf.xlu0
        %207 = vset.pattern.permute.xlu0 0
        %208 = vperm.xlu0 %207, %v190
        %v209 = vpop.permute.xlu0 %208
        %212 = vset.pattern.permute.xlu0 0
        %213 = vperm.xlu0 %212, %v191
        %v214 = vpop.permute.xlu0 %213
        %217 = vset.pattern.permute.xlu0 0
        %218 = vperm.xlu0 %217, %v192
        %v219 = vpop.permute.xlu0 %218
        %222 = vset.pattern.permute.xlu0 0
        %223 = vperm.xlu0 %222, %v193
        %v224 = vpop.permute.xlu0 %223
        %227 = vset.pattern.permute.xlu0 0
        %228 = vperm.xlu0 %227, %v194
        %v229 = vpop.permute.xlu0 %228
        %232 = vset.pattern.permute.xlu0 0
        %233 = vperm.xlu0 %232, %v195
        %v234 = vpop.permute.xlu0 %233
        %237 = vset.pattern.permute.xlu0 0
        %238 = vperm.xlu0 %237, %v196
        %v239 = vpop.permute.xlu0 %238
        %242 = vset.pattern.permute.xlu0 0
        %243 = vperm.xlu0 %242, %v197
        %v244 = vpop.permute.xlu0 %243
        %247 = vset.pattern.permute.xlu0 0
        %248 = vperm.xlu0 %247, %v198
        %v249 = vpop.permute.xlu0 %248
        %252 = vset.pattern.permute.xlu0 0
        %253 = vperm.xlu0 %252, %v199
        %v254 = vpop.permute.xlu0 %253
        %257 = vset.pattern.permute.xlu0 0
        %258 = vperm.xlu0 %257, %v200
        %v259 = vpop.permute.xlu0 %258
        %262 = vset.pattern.permute.xlu0 0
        %263 = vperm.xlu0 %262, %v201
        %v264 = vpop.permute.xlu0 %263
        %267 = vset.pattern.permute.xlu0 0
        %268 = vperm.xlu0 %267, %v202
        %v269 = vpop.permute.xlu0 %268
        %272 = vset.pattern.permute.xlu0 0
        %273 = vperm.xlu0 %272, %v203
        %v274 = vpop.permute.xlu0 %273
        %277 = vset.pattern.permute.xlu0 0
        %278 = vperm.xlu0 %277, %v204
        %v279 = vpop.permute.xlu0 %278
        %282 = vset.pattern.permute.xlu0 0
        %283 = vperm.xlu0 %282, %v205
        %v284 = vpop.permute.xlu0 %283
        %v286 = vlaneseq
        %v287 = vshrl.u32 %v286, 7
        %v288 = vsub.s32 2, %v287
        %v289 = vrot.slane %v173, %v288
        %v290 = vsub.f32 %v209, %v289
        %v291 = vsub.f32 %v214, %v289
        %v292 = vsub.f32 %v219, %v289
        %v293 = vsub.f32 %v224, %v289
        %v294 = vsub.f32 %v229, %v289
        %v295 = vsub.f32 %v234, %v289
        %v296 = vsub.f32 %v239, %v289
        %v297 = vsub.f32 %v244, %v289
        %v298 = vsub.f32 %v249, %v289
        %v299 = vsub.f32 %v254, %v289
        %v300 = vsub.f32 %v259, %v289
        %v301 = vsub.f32 %v264, %v289
        %v302 = vsub.f32 %v269, %v289
        %v303 = vsub.f32 %v274, %v289
        %v304 = vsub.f32 %v279, %v289
        %v305 = vsub.f32 %v284, %v289
        %v306 = vand.u32 2147483647, %v290
        %v307 = vand.u32 2147483647, %v291
        %v308 = vand.u32 2147483647, %v292
        %v309 = vand.u32 2147483647, %v293
        %v310 = vand.u32 2147483647, %v294
        %v311 = vand.u32 2147483647, %v295
        %v312 = vand.u32 2147483647, %v296
        %v313 = vand.u32 2147483647, %v297
        %v314 = vand.u32 2147483647, %v298
        %v315 = vand.u32 2147483647, %v299
        %v316 = vand.u32 2147483647, %v300
        %v317 = vand.u32 2147483647, %v301
        %v318 = vand.u32 2147483647, %v302
        %v319 = vand.u32 2147483647, %v303
        %v320 = vand.u32 2147483647, %v304
        %v321 = vand.u32 2147483647, %v305
        %322 = vset.pattern.permute.xlu0 1
        %323 = vperm.xlu0 %322, %v190
        %v324 = vpop.permute.xlu0 %323
        %326 = vset.pattern.permute.xlu0 1
        %327 = vperm.xlu0 %326, %v191
        %v328 = vpop.permute.xlu0 %327
        %330 = vset.pattern.permute.xlu0 1
        %331 = vperm.xlu0 %330, %v192
        %v332 = vpop.permute.xlu0 %331
        %334 = vset.pattern.permute.xlu0 1
        %335 = vperm.xlu0 %334, %v193
        %v336 = vpop.permute.xlu0 %335
        %338 = vset.pattern.permute.xlu0 1
        %339 = vperm.xlu0 %338, %v194
        %v340 = vpop.permute.xlu0 %339
        %342 = vset.pattern.permute.xlu0 1
        %343 = vperm.xlu0 %342, %v195
        %v344 = vpop.permute.xlu0 %343
        %346 = vset.pattern.permute.xlu0 1
        %347 = vperm.xlu0 %346, %v196
        %v348 = vpop.permute.xlu0 %347
        %350 = vset.pattern.permute.xlu0 1
        %351 = vperm.xlu0 %350, %v197
        %v352 = vpop.permute.xlu0 %351
        %354 = vset.pattern.permute.xlu0 1
        %355 = vperm.xlu0 %354, %v198
        %v356 = vpop.permute.xlu0 %355
        %358 = vset.pattern.permute.xlu0 1
        %359 = vperm.xlu0 %358, %v199
        %v360 = vpop.permute.xlu0 %359
        %362 = vset.pattern.permute.xlu0 1
        %363 = vperm.xlu0 %362, %v200
        %v364 = vpop.permute.xlu0 %363
        %366 = vset.pattern.permute.xlu0 1
        %367 = vperm.xlu0 %366, %v201
        %v368 = vpop.permute.xlu0 %367
        %370 = vset.pattern.permute.xlu0 1
        %371 = vperm.xlu0 %370, %v202
        %v372 = vpop.permute.xlu0 %371
        %374 = vset.pattern.permute.xlu0 1
        %375 = vperm.xlu0 %374, %v203
        %v376 = vpop.permute.xlu0 %375
        %378 = vset.pattern.permute.xlu0 1
        %379 = vperm.xlu0 %378, %v204
        %v380 = vpop.permute.xlu0 %379
        %382 = vset.pattern.permute.xlu0 1
        %383 = vperm.xlu0 %382, %v205
        %v384 = vpop.permute.xlu0 %383
        %v386 = vlaneseq
        %v387 = vshrl.u32 %v386, 7
        %v388 = vsub.s32 3, %v387
        %v389 = vrot.slane %v173, %v388
        %v390 = vsub.f32 %v324, %v389
        %v391 = vsub.f32 %v328, %v389
        %v392 = vsub.f32 %v332, %v389
        %v393 = vsub.f32 %v336, %v389
        %v394 = vsub.f32 %v340, %v389
        %v395 = vsub.f32 %v344, %v389
        %v396 = vsub.f32 %v348, %v389
        %v397 = vsub.f32 %v352, %v389
        %v398 = vsub.f32 %v356, %v389
        %v399 = vsub.f32 %v360, %v389
        %v400 = vsub.f32 %v364, %v389
        %v401 = vsub.f32 %v368, %v389
        %v402 = vsub.f32 %v372, %v389
        %v403 = vsub.f32 %v376, %v389
        %v404 = vsub.f32 %v380, %v389
        %v405 = vsub.f32 %v384, %v389
        %v406 = vand.u32 2147483647, %v390
        %v407 = vand.u32 2147483647, %v391
        %v408 = vand.u32 2147483647, %v392
        %v409 = vand.u32 2147483647, %v393
        %v410 = vand.u32 2147483647, %v394
        %v411 = vand.u32 2147483647, %v395
        %v412 = vand.u32 2147483647, %v396
        %v413 = vand.u32 2147483647, %v397
        %v414 = vand.u32 2147483647, %v398
        %v415 = vand.u32 2147483647, %v399
        %v416 = vand.u32 2147483647, %v400
        %v417 = vand.u32 2147483647, %v401
        %v418 = vand.u32 2147483647, %v402
        %v419 = vand.u32 2147483647, %v403
        %v420 = vand.u32 2147483647, %v404
        %v421 = vand.u32 2147483647, %v405
        %v422 = vmax.f32 %v306, %v406
        %v423 = vmax.f32 %v307, %v407
        %v424 = vmax.f32 %v308, %v408
        %v425 = vmax.f32 %v309, %v409
        %v426 = vmax.f32 %v310, %v410
        %v427 = vmax.f32 %v311, %v411
        %v428 = vmax.f32 %v312, %v412
        %v429 = vmax.f32 %v313, %v413
        %v430 = vmax.f32 %v314, %v414
        %v431 = vmax.f32 %v315, %v415
        %v432 = vmax.f32 %v316, %v416
        %v433 = vmax.f32 %v317, %v417
        %v434 = vmax.f32 %v318, %v418
        %v435 = vmax.f32 %v319, %v419
        %v436 = vmax.f32 %v320, %v420
        %v437 = vmax.f32 %v321, %v421
        %438 = vrot.lane.b32.xlu0 %v190, 1
        %v439 = vpop.permute.xlu0 %438
        %440 = vrot.lane.b32.xlu0 %v191, 1
        %v441 = vpop.permute.xlu0 %440
        %442 = vrot.lane.b32.xlu0 %v192, 1
        %v443 = vpop.permute.xlu0 %442
        %444 = vrot.lane.b32.xlu0 %v193, 1
        %v445 = vpop.permute.xlu0 %444
        %446 = vrot.lane.b32.xlu0 %v194, 1
        %v447 = vpop.permute.xlu0 %446
        %448 = vrot.lane.b32.xlu0 %v195, 1
        %v449 = vpop.permute.xlu0 %448
        %450 = vrot.lane.b32.xlu0 %v196, 1
        %v451 = vpop.permute.xlu0 %450
        %452 = vrot.lane.b32.xlu0 %v197, 1
        %v453 = vpop.permute.xlu0 %452
        %454 = vrot.lane.b32.xlu0 %v198, 1
        %v455 = vpop.permute.xlu0 %454
        %456 = vrot.lane.b32.xlu0 %v199, 1
        %v457 = vpop.permute.xlu0 %456
        %458 = vrot.lane.b32.xlu0 %v200, 1
        %v459 = vpop.permute.xlu0 %458
        %460 = vrot.lane.b32.xlu0 %v201, 1
        %v461 = vpop.permute.xlu0 %460
        %462 = vrot.lane.b32.xlu0 %v202, 1
        %v463 = vpop.permute.xlu0 %462
        %464 = vrot.lane.b32.xlu0 %v203, 1
        %v465 = vpop.permute.xlu0 %464
        %466 = vrot.lane.b32.xlu0 %v204, 1
        %v467 = vpop.permute.xlu0 %466
        %468 = vrot.lane.b32.xlu0 %v205, 1
        %v469 = vpop.permute.xlu0 %468
        %v486 = vsub.f32 %v190, %v439
        %v487 = vsub.f32 %v191, %v441
        %v488 = vsub.f32 %v192, %v443
        %v489 = vsub.f32 %v193, %v445
        %v490 = vsub.f32 %v194, %v447
        %v491 = vsub.f32 %v195, %v449
        %v492 = vsub.f32 %v196, %v451
        %v493 = vsub.f32 %v197, %v453
        %v494 = vsub.f32 %v198, %v455
        %v495 = vsub.f32 %v199, %v457
        %v496 = vsub.f32 %v200, %v459
        %v497 = vsub.f32 %v201, %v461
        %v498 = vsub.f32 %v202, %v463
        %v499 = vsub.f32 %v203, %v465
        %v500 = vsub.f32 %v204, %v467
        %v501 = vsub.f32 %v205, %v469
        %v502 = vand.u32 2147483647, %v486
        %v503 = vand.u32 2147483647, %v487
        %v504 = vand.u32 2147483647, %v488
        %v505 = vand.u32 2147483647, %v489
        %v506 = vand.u32 2147483647, %v490
        %v507 = vand.u32 2147483647, %v491
        %v508 = vand.u32 2147483647, %v492
        %v509 = vand.u32 2147483647, %v493
        %v510 = vand.u32 2147483647, %v494
        %v511 = vand.u32 2147483647, %v495
        %v512 = vand.u32 2147483647, %v496
        %v513 = vand.u32 2147483647, %v497
        %v514 = vand.u32 2147483647, %v498
        %v515 = vand.u32 2147483647, %v499
        %v516 = vand.u32 2147483647, %v500
        %v517 = vand.u32 2147483647, %v501
        %v518 = vmul.f32 %v502, 0.5
        %v519 = vmul.f32 %v503, 0.5
        %v520 = vmul.f32 %v504, 0.5
        %v521 = vmul.f32 %v505, 0.5
        %v522 = vmul.f32 %v506, 0.5
        %v523 = vmul.f32 %v507, 0.5
        %v524 = vmul.f32 %v508, 0.5
        %v525 = vmul.f32 %v509, 0.5
        %v526 = vmul.f32 %v510, 0.5
        %v527 = vmul.f32 %v511, 0.5
        %v528 = vmul.f32 %v512, 0.5
        %v529 = vmul.f32 %v513, 0.5
        %v530 = vmul.f32 %v514, 0.5
        %v531 = vmul.f32 %v515, 0.5
        %v532 = vmul.f32 %v516, 0.5
        %v533 = vmul.f32 %v517, 0.5
        %v535 = vrot.slane %v173, 7
        %v537 = vsub.f32 %v173, %v535
        %v538 = vand.u32 2147483647, %v537
        %v539 = vmul.f32 %v538, 0.5
        %vm540 = vmand %vm156, %vm172
        %vm541 = vmand %vm157, %vm172
        %vm542 = vmand %vm158, %vm172
        %vm543 = vmand %vm159, %vm172
        %vm544 = vmand %vm160, %vm172
        %vm545 = vmand %vm161, %vm172
        %vm546 = vmand %vm162, %vm172
        %vm547 = vmand %vm163, %vm172
        %vm548 = vmand %vm164, %vm172
        %vm549 = vmand %vm165, %vm172
        %vm550 = vmand %vm166, %vm172
        %vm551 = vmand %vm167, %vm172
        %vm552 = vmand %vm168, %vm172
        %vm553 = vmand %vm169, %vm172
        %vm554 = vmand %vm170, %vm172
        %vm555 = vmand %vm171, %vm172
        %v556 = vlaneseq
        %v557 = vshrl.u32 %v556, 7
        %v558 = vsub.s32 3, %v557
        %v559 = vrot.slane %v539, %v558
        %v560 = vsel %vm172, %v559, 0.0
        %562 = vset.pattern.permute.xlu0 1
        %563 = vperm.xlu0 %562, %v518
        %v564 = vpop.permute.xlu0 %563
        %567 = vset.pattern.permute.xlu0 1
        %568 = vperm.xlu0 %567, %v519
        %v569 = vpop.permute.xlu0 %568
        %572 = vset.pattern.permute.xlu0 1
        %573 = vperm.xlu0 %572, %v520
        %v574 = vpop.permute.xlu0 %573
        %577 = vset.pattern.permute.xlu0 1
        %578 = vperm.xlu0 %577, %v521
        %v579 = vpop.permute.xlu0 %578
        %582 = vset.pattern.permute.xlu0 1
        %583 = vperm.xlu0 %582, %v522
        %v584 = vpop.permute.xlu0 %583
        %587 = vset.pattern.permute.xlu0 1
        %588 = vperm.xlu0 %587, %v523
        %v589 = vpop.permute.xlu0 %588
        %592 = vset.pattern.permute.xlu0 1
        %593 = vperm.xlu0 %592, %v524
        %v594 = vpop.permute.xlu0 %593
        %597 = vset.pattern.permute.xlu0 1
        %598 = vperm.xlu0 %597, %v525
        %v599 = vpop.permute.xlu0 %598
        %602 = vset.pattern.permute.xlu0 1
        %603 = vperm.xlu0 %602, %v526
        %v604 = vpop.permute.xlu0 %603
        %607 = vset.pattern.permute.xlu0 1
        %608 = vperm.xlu0 %607, %v527
        %v609 = vpop.permute.xlu0 %608
        %612 = vset.pattern.permute.xlu0 1
        %613 = vperm.xlu0 %612, %v528
        %v614 = vpop.permute.xlu0 %613
        %617 = vset.pattern.permute.xlu0 1
        %618 = vperm.xlu0 %617, %v529
        %v619 = vpop.permute.xlu0 %618
        %622 = vset.pattern.permute.xlu0 1
        %623 = vperm.xlu0 %622, %v530
        %v624 = vpop.permute.xlu0 %623
        %627 = vset.pattern.permute.xlu0 1
        %628 = vperm.xlu0 %627, %v531
        %v629 = vpop.permute.xlu0 %628
        %632 = vset.pattern.permute.xlu0 1
        %633 = vperm.xlu0 %632, %v532
        %v634 = vpop.permute.xlu0 %633
        %637 = vset.pattern.permute.xlu0 1
        %638 = vperm.xlu0 %637, %v533
        %v639 = vpop.permute.xlu0 %638
        %v641 = vsel %vm156, %v564, %v560
        %v642 = vsel %vm157, %v569, %v560
        %v643 = vsel %vm158, %v574, %v560
        %v644 = vsel %vm159, %v579, %v560
        %v645 = vsel %vm160, %v584, %v560
        %v646 = vsel %vm161, %v589, %v560
        %v647 = vsel %vm162, %v594, %v560
        %v648 = vsel %vm163, %v599, %v560
        %v649 = vsel %vm164, %v604, %v560
        %v650 = vsel %vm165, %v609, %v560
        %v651 = vsel %vm166, %v614, %v560
        %v652 = vsel %vm167, %v619, %v560
        %v653 = vsel %vm168, %v624, %v560
        %v654 = vsel %vm169, %v629, %v560
        %v655 = vsel %vm170, %v634, %v560
        %v656 = vsel %vm171, %v639, %v560
        %v657 = vsel %vm540, %v422, %v641
        %v658 = vsel %vm541, %v423, %v642
        %v659 = vsel %vm542, %v424, %v643
        %v660 = vsel %vm543, %v425, %v644
        %v661 = vsel %vm544, %v426, %v645
        %v662 = vsel %vm545, %v427, %v646
        %v663 = vsel %vm546, %v428, %v647
        %v664 = vsel %vm547, %v429, %v648
        %v665 = vsel %vm548, %v430, %v649
        %v666 = vsel %vm549, %v431, %v650
        %v667 = vsel %vm550, %v432, %v651
        %v668 = vsel %vm551, %v433, %v652
        %v669 = vsel %vm552, %v434, %v653
        %v670 = vsel %vm553, %v435, %v654
        %v671 = vsel %vm554, %v436, %v655
        %v672 = vsel %vm555, %v437, %v656
        %v673 = vmul.f32 %v657, %v657
        %v674 = vmul.f32 %v658, %v658
        %v675 = vmul.f32 %v659, %v659
        %v676 = vmul.f32 %v660, %v660
        %v677 = vmul.f32 %v661, %v661
        %v678 = vmul.f32 %v662, %v662
        %v679 = vmul.f32 %v663, %v663
        %v680 = vmul.f32 %v664, %v664
        %v681 = vmul.f32 %v665, %v665
        %v682 = vmul.f32 %v666, %v666
        %v683 = vmul.f32 %v667, %v667
        %v684 = vmul.f32 %v668, %v668
        %v685 = vmul.f32 %v669, %v669
        %v686 = vmul.f32 %v670, %v670
        %v687 = vmul.f32 %v671, %v671
        %v688 = vmul.f32 %v672, %v672
        %689 = vst [vmem:[%s134] sm:$0xff] %v673
        %690 = vst [vmem:[%s134 + $0x8] sm:$0xff] %v674
        %691 = vst [vmem:[%s134 + $0x10] sm:$0xff] %v675
        %692 = vst [vmem:[%s134 + $0x18] sm:$0xff] %v676
        %693 = vst [vmem:[%s134 + $0x20] sm:$0xff] %v677
        %694 = vst [vmem:[%s134 + $0x28] sm:$0xff] %v678
        %695 = vst [vmem:[%s134 + $0x30] sm:$0xff] %v679
        %696 = vst [vmem:[%s134 + $0x38] sm:$0xff] %v680
        %697 = vst [vmem:[%s134 + $0x40] sm:$0xff] %v681
        %698 = vst [vmem:[%s134 + $0x48] sm:$0xff] %v682
        %699 = vst [vmem:[%s134 + $0x50] sm:$0xff] %v683
        %700 = vst [vmem:[%s134 + $0x58] sm:$0xff] %v684
        %701 = vst [vmem:[%s134 + $0x60] sm:$0xff] %v685
        %702 = vst [vmem:[%s134 + $0x68] sm:$0xff] %v686
        %703 = vst [vmem:[%s134 + $0x70] sm:$0xff] %v687
        %704 = vst [vmem:[%s134 + $0x78] sm:$0xff] %v688
        %s705 = scalar_lea.vmem %s116, 8 [#allocation2]
        %v706 = vld [vmem:[%s705] sm:$0xff]
        %707 = vxpose.xlu0.b32.start [1/16] %v706, 128
        %708 = vxpose.xlu0.b32.cont [2/16] 0.0, 128
        %709 = vxpose.xlu0.b32.cont [3/16] 0.0, 128
        %710 = vxpose.xlu0.b32.cont [4/16] 0.0, 128
        %711 = vxpose.xlu0.b32.cont [5/16] 0.0, 128
        %712 = vxpose.xlu0.b32.cont [6/16] 0.0, 128
        %713 = vxpose.xlu0.b32.cont [7/16] 0.0, 128
        %714 = vxpose.xlu0.b32.cont [8/16] 0.0, 128
        %715 = vxpose.xlu0.b32.cont [9/16] 0.0, 128
        %716 = vxpose.xlu0.b32.cont [10/16] 0.0, 128
        %717 = vxpose.xlu0.b32.cont [11/16] 0.0, 128
        %718 = vxpose.xlu0.b32.cont [12/16] 0.0, 128
        %719 = vxpose.xlu0.b32.cont [13/16] 0.0, 128
        %720 = vxpose.xlu0.b32.cont [14/16] 0.0, 128
        %721 = vxpose.xlu0.b32.cont [15/16] 0.0, 128
        %722 = vxpose.xlu0.b32.end [16/16] 0.0, 128
        %v723 = vpop.trf.xlu0
        %v724 = vpop.trf.xlu0
        %v725 = vpop.trf.xlu0
        %v726 = vpop.trf.xlu0
        %v727 = vpop.trf.xlu0
        %v728 = vpop.trf.xlu0
        %v729 = vpop.trf.xlu0
        %v730 = vpop.trf.xlu0
        %v731 = vpop.trf.xlu0
        %v732 = vpop.trf.xlu0
        %v733 = vpop.trf.xlu0
        %v734 = vpop.trf.xlu0
        %v735 = vpop.trf.xlu0
        %v736 = vpop.trf.xlu0
        %v737 = vpop.trf.xlu0
        %v738 = vpop.trf.xlu0
        %740 = vset.pattern.permute.xlu0 0
        %741 = vperm.xlu0 %740, %v723
        %v742 = vpop.permute.xlu0 %741
        %745 = vset.pattern.permute.xlu0 0
        %746 = vperm.xlu0 %745, %v724
        %v747 = vpop.permute.xlu0 %746
        %750 = vset.pattern.permute.xlu0 0
        %751 = vperm.xlu0 %750, %v725
        %v752 = vpop.permute.xlu0 %751
        %755 = vset.pattern.permute.xlu0 0
        %756 = vperm.xlu0 %755, %v726
        %v757 = vpop.permute.xlu0 %756
        %760 = vset.pattern.permute.xlu0 0
        %761 = vperm.xlu0 %760, %v727
        %v762 = vpop.permute.xlu0 %761
        %765 = vset.pattern.permute.xlu0 0
        %766 = vperm.xlu0 %765, %v728
        %v767 = vpop.permute.xlu0 %766
        %770 = vset.pattern.permute.xlu0 0
        %771 = vperm.xlu0 %770, %v729
        %v772 = vpop.permute.xlu0 %771
        %775 = vset.pattern.permute.xlu0 0
        %776 = vperm.xlu0 %775, %v730
        %v777 = vpop.permute.xlu0 %776
        %780 = vset.pattern.permute.xlu0 0
        %781 = vperm.xlu0 %780, %v731
        %v782 = vpop.permute.xlu0 %781
        %785 = vset.pattern.permute.xlu0 0
        %786 = vperm.xlu0 %785, %v732
        %v787 = vpop.permute.xlu0 %786
        %790 = vset.pattern.permute.xlu0 0
        %791 = vperm.xlu0 %790, %v733
        %v792 = vpop.permute.xlu0 %791
        %795 = vset.pattern.permute.xlu0 0
        %796 = vperm.xlu0 %795, %v734
        %v797 = vpop.permute.xlu0 %796
        %800 = vset.pattern.permute.xlu0 0
        %801 = vperm.xlu0 %800, %v735
        %v802 = vpop.permute.xlu0 %801
        %805 = vset.pattern.permute.xlu0 0
        %806 = vperm.xlu0 %805, %v736
        %v807 = vpop.permute.xlu0 %806
        %810 = vset.pattern.permute.xlu0 0
        %811 = vperm.xlu0 %810, %v737
        %v812 = vpop.permute.xlu0 %811
        %815 = vset.pattern.permute.xlu0 0
        %816 = vperm.xlu0 %815, %v738
        %v817 = vpop.permute.xlu0 %816
        %v819 = vlaneseq
        %v820 = vshrl.u32 %v819, 7
        %v821 = vsub.s32 2, %v820
        %v822 = vrot.slane %v706, %v821
        %v823 = vsub.f32 %v742, %v822
        %v824 = vsub.f32 %v747, %v822
        %v825 = vsub.f32 %v752, %v822
        %v826 = vsub.f32 %v757, %v822
        %v827 = vsub.f32 %v762, %v822
        %v828 = vsub.f32 %v767, %v822
        %v829 = vsub.f32 %v772, %v822
        %v830 = vsub.f32 %v777, %v822
        %v831 = vsub.f32 %v782, %v822
        %v832 = vsub.f32 %v787, %v822
        %v833 = vsub.f32 %v792, %v822
        %v834 = vsub.f32 %v797, %v822
        %v835 = vsub.f32 %v802, %v822
        %v836 = vsub.f32 %v807, %v822
        %v837 = vsub.f32 %v812, %v822
        %v838 = vsub.f32 %v817, %v822
        %v839 = vand.u32 2147483647, %v823
        %v840 = vand.u32 2147483647, %v824
        %v841 = vand.u32 2147483647, %v825
        %v842 = vand.u32 2147483647, %v826
        %v843 = vand.u32 2147483647, %v827
        %v844 = vand.u32 2147483647, %v828
        %v845 = vand.u32 2147483647, %v829
        %v846 = vand.u32 2147483647, %v830
        %v847 = vand.u32 2147483647, %v831
        %v848 = vand.u32 2147483647, %v832
        %v849 = vand.u32 2147483647, %v833
        %v850 = vand.u32 2147483647, %v834
        %v851 = vand.u32 2147483647, %v835
        %v852 = vand.u32 2147483647, %v836
        %v853 = vand.u32 2147483647, %v837
        %v854 = vand.u32 2147483647, %v838
        %855 = vset.pattern.permute.xlu0 1
        %856 = vperm.xlu0 %855, %v723
        %v857 = vpop.permute.xlu0 %856
        %859 = vset.pattern.permute.xlu0 1
        %860 = vperm.xlu0 %859, %v724
        %v861 = vpop.permute.xlu0 %860
        %863 = vset.pattern.permute.xlu0 1
        %864 = vperm.xlu0 %863, %v725
        %v865 = vpop.permute.xlu0 %864
        %867 = vset.pattern.permute.xlu0 1
        %868 = vperm.xlu0 %867, %v726
        %v869 = vpop.permute.xlu0 %868
        %871 = vset.pattern.permute.xlu0 1
        %872 = vperm.xlu0 %871, %v727
        %v873 = vpop.permute.xlu0 %872
        %875 = vset.pattern.permute.xlu0 1
        %876 = vperm.xlu0 %875, %v728
        %v877 = vpop.permute.xlu0 %876
        %879 = vset.pattern.permute.xlu0 1
        %880 = vperm.xlu0 %879, %v729
        %v881 = vpop.permute.xlu0 %880
        %883 = vset.pattern.permute.xlu0 1
        %884 = vperm.xlu0 %883, %v730
        %v885 = vpop.permute.xlu0 %884
        %887 = vset.pattern.permute.xlu0 1
        %888 = vperm.xlu0 %887, %v731
        %v889 = vpop.permute.xlu0 %888
        %891 = vset.pattern.permute.xlu0 1
        %892 = vperm.xlu0 %891, %v732
        %v893 = vpop.permute.xlu0 %892
        %895 = vset.pattern.permute.xlu0 1
        %896 = vperm.xlu0 %895, %v733
        %v897 = vpop.permute.xlu0 %896
        %899 = vset.pattern.permute.xlu0 1
        %900 = vperm.xlu0 %899, %v734
        %v901 = vpop.permute.xlu0 %900
        %903 = vset.pattern.permute.xlu0 1
        %904 = vperm.xlu0 %903, %v735
        %v905 = vpop.permute.xlu0 %904
        %907 = vset.pattern.permute.xlu0 1
        %908 = vperm.xlu0 %907, %v736
        %v909 = vpop.permute.xlu0 %908
        %911 = vset.pattern.permute.xlu0 1
        %912 = vperm.xlu0 %911, %v737
        %v913 = vpop.permute.xlu0 %912
        %915 = vset.pattern.permute.xlu0 1
        %916 = vperm.xlu0 %915, %v738
        %v917 = vpop.permute.xlu0 %916
        %v919 = vlaneseq
        %v920 = vshrl.u32 %v919, 7
        %v921 = vsub.s32 3, %v920
        %v922 = vrot.slane %v706, %v921
        %v923 = vsub.f32 %v857, %v922
        %v924 = vsub.f32 %v861, %v922
        %v925 = vsub.f32 %v865, %v922
        %v926 = vsub.f32 %v869, %v922
        %v927 = vsub.f32 %v873, %v922
        %v928 = vsub.f32 %v877, %v922
        %v929 = vsub.f32 %v881, %v922
        %v930 = vsub.f32 %v885, %v922
        %v931 = vsub.f32 %v889, %v922
        %v932 = vsub.f32 %v893, %v922
        %v933 = vsub.f32 %v897, %v922
        %v934 = vsub.f32 %v901, %v922
        %v935 = vsub.f32 %v905, %v922
        %v936 = vsub.f32 %v909, %v922
        %v937 = vsub.f32 %v913, %v922
        %v938 = vsub.f32 %v917, %v922
        %v939 = vand.u32 2147483647, %v923
        %v940 = vand.u32 2147483647, %v924
        %v941 = vand.u32 2147483647, %v925
        %v942 = vand.u32 2147483647, %v926
        %v943 = vand.u32 2147483647, %v927
        %v944 = vand.u32 2147483647, %v928
        %v945 = vand.u32 2147483647, %v929
        %v946 = vand.u32 2147483647, %v930
        %v947 = vand.u32 2147483647, %v931
        %v948 = vand.u32 2147483647, %v932
        %v949 = vand.u32 2147483647, %v933
        %v950 = vand.u32 2147483647, %v934
        %v951 = vand.u32 2147483647, %v935
        %v952 = vand.u32 2147483647, %v936
        %v953 = vand.u32 2147483647, %v937
        %v954 = vand.u32 2147483647, %v938
        %v955 = vmax.f32 %v839, %v939
        %v956 = vmax.f32 %v840, %v940
        %v957 = vmax.f32 %v841, %v941
        %v958 = vmax.f32 %v842, %v942
        %v959 = vmax.f32 %v843, %v943
        %v960 = vmax.f32 %v844, %v944
        %v961 = vmax.f32 %v845, %v945
        %v962 = vmax.f32 %v846, %v946
        %v963 = vmax.f32 %v847, %v947
        %v964 = vmax.f32 %v848, %v948
        %v965 = vmax.f32 %v849, %v949
        %v966 = vmax.f32 %v850, %v950
        %v967 = vmax.f32 %v851, %v951
        %v968 = vmax.f32 %v852, %v952
        %v969 = vmax.f32 %v853, %v953
        %v970 = vmax.f32 %v854, %v954
        %971 = vrot.lane.b32.xlu0 %v723, 1
        %v972 = vpop.permute.xlu0 %971
        %973 = vrot.lane.b32.xlu0 %v724, 1
        %v974 = vpop.permute.xlu0 %973
        %975 = vrot.lane.b32.xlu0 %v725, 1
        %v976 = vpop.permute.xlu0 %975
        %977 = vrot.lane.b32.xlu0 %v726, 1
        %v978 = vpop.permute.xlu0 %977
        %979 = vrot.lane.b32.xlu0 %v727, 1
        %v980 = vpop.permute.xlu0 %979
        %981 = vrot.lane.b32.xlu0 %v728, 1
        %v982 = vpop.permute.xlu0 %981
        %983 = vrot.lane.b32.xlu0 %v729, 1
        %v984 = vpop.permute.xlu0 %983
        %985 = vrot.lane.b32.xlu0 %v730, 1
        %v986 = vpop.permute.xlu0 %985
        %987 = vrot.lane.b32.xlu0 %v731, 1
        %v988 = vpop.permute.xlu0 %987
        %989 = vrot.lane.b32.xlu0 %v732, 1
        %v990 = vpop.permute.xlu0 %989
        %991 = vrot.lane.b32.xlu0 %v733, 1
        %v992 = vpop.permute.xlu0 %991
        %993 = vrot.lane.b32.xlu0 %v734, 1
        %v994 = vpop.permute.xlu0 %993
        %995 = vrot.lane.b32.xlu0 %v735, 1
        %v996 = vpop.permute.xlu0 %995
        %997 = vrot.lane.b32.xlu0 %v736, 1
        %v998 = vpop.permute.xlu0 %997
        %999 = vrot.lane.b32.xlu0 %v737, 1
        %v1000 = vpop.permute.xlu0 %999
        %1001 = vrot.lane.b32.xlu0 %v738, 1
        %v1002 = vpop.permute.xlu0 %1001
        %v1019 = vsub.f32 %v723, %v972
        %v1020 = vsub.f32 %v724, %v974
        %v1021 = vsub.f32 %v725, %v976
        %v1022 = vsub.f32 %v726, %v978
        %v1023 = vsub.f32 %v727, %v980
        %v1024 = vsub.f32 %v728, %v982
        %v1025 = vsub.f32 %v729, %v984
        %v1026 = vsub.f32 %v730, %v986
        %v1027 = vsub.f32 %v731, %v988
        %v1028 = vsub.f32 %v732, %v990
        %v1029 = vsub.f32 %v733, %v992
        %v1030 = vsub.f32 %v734, %v994
        %v1031 = vsub.f32 %v735, %v996
        %v1032 = vsub.f32 %v736, %v998
        %v1033 = vsub.f32 %v737, %v1000
        %v1034 = vsub.f32 %v738, %v1002
        %v1035 = vand.u32 2147483647, %v1019
        %v1036 = vand.u32 2147483647, %v1020
        %v1037 = vand.u32 2147483647, %v1021
        %v1038 = vand.u32 2147483647, %v1022
        %v1039 = vand.u32 2147483647, %v1023
        %v1040 = vand.u32 2147483647, %v1024
        %v1041 = vand.u32 2147483647, %v1025
        %v1042 = vand.u32 2147483647, %v1026
        %v1043 = vand.u32 2147483647, %v1027
        %v1044 = vand.u32 2147483647, %v1028
        %v1045 = vand.u32 2147483647, %v1029
        %v1046 = vand.u32 2147483647, %v1030
        %v1047 = vand.u32 2147483647, %v1031
        %v1048 = vand.u32 2147483647, %v1032
        %v1049 = vand.u32 2147483647, %v1033
        %v1050 = vand.u32 2147483647, %v1034
        %v1051 = vmul.f32 %v1035, 0.5
        %v1052 = vmul.f32 %v1036, 0.5
        %v1053 = vmul.f32 %v1037, 0.5
        %v1054 = vmul.f32 %v1038, 0.5
        %v1055 = vmul.f32 %v1039, 0.5
        %v1056 = vmul.f32 %v1040, 0.5
        %v1057 = vmul.f32 %v1041, 0.5
        %v1058 = vmul.f32 %v1042, 0.5
        %v1059 = vmul.f32 %v1043, 0.5
        %v1060 = vmul.f32 %v1044, 0.5
        %v1061 = vmul.f32 %v1045, 0.5
        %v1062 = vmul.f32 %v1046, 0.5
        %v1063 = vmul.f32 %v1047, 0.5
        %v1064 = vmul.f32 %v1048, 0.5
        %v1065 = vmul.f32 %v1049, 0.5
        %v1066 = vmul.f32 %v1050, 0.5
        %v1068 = vrot.slane %v706, 7
        %v1070 = vsub.f32 %v706, %v1068
        %v1071 = vand.u32 2147483647, %v1070
        %v1072 = vmul.f32 %v1071, 0.5
        %v1073 = vlaneseq
        %v1074 = vshrl.u32 %v1073, 7
        %v1075 = vsub.s32 3, %v1074
        %v1076 = vrot.slane %v1072, %v1075
        %v1077 = vsel %vm172, %v1076, 0.0
        %1079 = vset.pattern.permute.xlu0 1
        %1080 = vperm.xlu0 %1079, %v1051
        %v1081 = vpop.permute.xlu0 %1080
        %1084 = vset.pattern.permute.xlu0 1
        %1085 = vperm.xlu0 %1084, %v1052
        %v1086 = vpop.permute.xlu0 %1085
        %1089 = vset.pattern.permute.xlu0 1
        %1090 = vperm.xlu0 %1089, %v1053
        %v1091 = vpop.permute.xlu0 %1090
        %1094 = vset.pattern.permute.xlu0 1
        %1095 = vperm.xlu0 %1094, %v1054
        %v1096 = vpop.permute.xlu0 %1095
        %1099 = vset.pattern.permute.xlu0 1
        %1100 = vperm.xlu0 %1099, %v1055
        %v1101 = vpop.permute.xlu0 %1100
        %1104 = vset.pattern.permute.xlu0 1
        %1105 = vperm.xlu0 %1104, %v1056
        %v1106 = vpop.permute.xlu0 %1105
        %1109 = vset.pattern.permute.xlu0 1
        %1110 = vperm.xlu0 %1109, %v1057
        %v1111 = vpop.permute.xlu0 %1110
        %1114 = vset.pattern.permute.xlu0 1
        %1115 = vperm.xlu0 %1114, %v1058
        %v1116 = vpop.permute.xlu0 %1115
        %1119 = vset.pattern.permute.xlu0 1
        %1120 = vperm.xlu0 %1119, %v1059
        %v1121 = vpop.permute.xlu0 %1120
        %1124 = vset.pattern.permute.xlu0 1
        %1125 = vperm.xlu0 %1124, %v1060
        %v1126 = vpop.permute.xlu0 %1125
        %1129 = vset.pattern.permute.xlu0 1
        %1130 = vperm.xlu0 %1129, %v1061
        %v1131 = vpop.permute.xlu0 %1130
        %1134 = vset.pattern.permute.xlu0 1
        %1135 = vperm.xlu0 %1134, %v1062
        %v1136 = vpop.permute.xlu0 %1135
        %1139 = vset.pattern.permute.xlu0 1
        %1140 = vperm.xlu0 %1139, %v1063
        %v1141 = vpop.permute.xlu0 %1140
        %1144 = vset.pattern.permute.xlu0 1
        %1145 = vperm.xlu0 %1144, %v1064
        %v1146 = vpop.permute.xlu0 %1145
        %1149 = vset.pattern.permute.xlu0 1
        %1150 = vperm.xlu0 %1149, %v1065
        %v1151 = vpop.permute.xlu0 %1150
        %1154 = vset.pattern.permute.xlu0 1
        %1155 = vperm.xlu0 %1154, %v1066
        %v1156 = vpop.permute.xlu0 %1155
        %v1158 = vsel %vm156, %v1081, %v1077
        %v1159 = vsel %vm157, %v1086, %v1077
        %v1160 = vsel %vm158, %v1091, %v1077
        %v1161 = vsel %vm159, %v1096, %v1077
        %v1162 = vsel %vm160, %v1101, %v1077
        %v1163 = vsel %vm161, %v1106, %v1077
        %v1164 = vsel %vm162, %v1111, %v1077
        %v1165 = vsel %vm163, %v1116, %v1077
        %v1166 = vsel %vm164, %v1121, %v1077
        %v1167 = vsel %vm165, %v1126, %v1077
        %v1168 = vsel %vm166, %v1131, %v1077
        %v1169 = vsel %vm167, %v1136, %v1077
        %v1170 = vsel %vm168, %v1141, %v1077
        %v1171 = vsel %vm169, %v1146, %v1077
        %v1172 = vsel %vm170, %v1151, %v1077
        %v1173 = vsel %vm171, %v1156, %v1077
        %v1174 = vsel %vm540, %v955, %v1158
        %v1175 = vsel %vm541, %v956, %v1159
        %v1176 = vsel %vm542, %v957, %v1160
        %v1177 = vsel %vm543, %v958, %v1161
        %v1178 = vsel %vm544, %v959, %v1162
        %v1179 = vsel %vm545, %v960, %v1163
        %v1180 = vsel %vm546, %v961, %v1164
        %v1181 = vsel %vm547, %v962, %v1165
        %v1182 = vsel %vm548, %v963, %v1166
        %v1183 = vsel %vm549, %v964, %v1167
        %v1184 = vsel %vm550, %v965, %v1168
        %v1185 = vsel %vm551, %v966, %v1169
        %v1186 = vsel %vm552, %v967, %v1170
        %v1187 = vsel %vm553, %v968, %v1171
        %v1188 = vsel %vm554, %v969, %v1172
        %v1189 = vsel %vm555, %v970, %v1173
        %v1190 = vmul.f32 %v1174, %v1174
        %v1191 = vmul.f32 %v1175, %v1175
        %v1192 = vmul.f32 %v1176, %v1176
        %v1193 = vmul.f32 %v1177, %v1177
        %v1194 = vmul.f32 %v1178, %v1178
        %v1195 = vmul.f32 %v1179, %v1179
        %v1196 = vmul.f32 %v1180, %v1180
        %v1197 = vmul.f32 %v1181, %v1181
        %v1198 = vmul.f32 %v1182, %v1182
        %v1199 = vmul.f32 %v1183, %v1183
        %v1200 = vmul.f32 %v1184, %v1184
        %v1201 = vmul.f32 %v1185, %v1185
        %v1202 = vmul.f32 %v1186, %v1186
        %v1203 = vmul.f32 %v1187, %v1187
        %v1204 = vmul.f32 %v1188, %v1188
        %v1205 = vmul.f32 %v1189, %v1189
        %s1206 = scalar_lea.vmem %s134, 128 [#allocation5]
        %1207 = vst [vmem:[%s1206] sm:$0xff] %v1190
        %1208 = vst [vmem:[%s1206 + $0x8] sm:$0xff] %v1191
        %1209 = vst [vmem:[%s1206 + $0x10] sm:$0xff] %v1192
        %1210 = vst [vmem:[%s1206 + $0x18] sm:$0xff] %v1193
        %1211 = vst [vmem:[%s1206 + $0x20] sm:$0xff] %v1194
        %1212 = vst [vmem:[%s1206 + $0x28] sm:$0xff] %v1195
        %1213 = vst [vmem:[%s1206 + $0x30] sm:$0xff] %v1196
        %1214 = vst [vmem:[%s1206 + $0x38] sm:$0xff] %v1197
        %1215 = vst [vmem:[%s1206 + $0x40] sm:$0xff] %v1198
        %1216 = vst [vmem:[%s1206 + $0x48] sm:$0xff] %v1199
        %1217 = vst [vmem:[%s1206 + $0x50] sm:$0xff] %v1200
        %1218 = vst [vmem:[%s1206 + $0x58] sm:$0xff] %v1201
        %1219 = vst [vmem:[%s1206 + $0x60] sm:$0xff] %v1202
        %1220 = vst [vmem:[%s1206 + $0x68] sm:$0xff] %v1203
        %1221 = vst [vmem:[%s1206 + $0x70] sm:$0xff] %v1204
        %1222 = vst [vmem:[%s1206 + $0x78] sm:$0xff] %v1205
        %s1223 = scalar_lea.vmem %s116, 16 [#allocation2]
        %v1224 = vld [vmem:[%s1223] sm:$0xff]
        %1225 = vxpose.xlu0.b32.start [1/16] %v1224, 128
        %1226 = vxpose.xlu0.b32.cont [2/16] 0.0, 128
        %1227 = vxpose.xlu0.b32.cont [3/16] 0.0, 128
        %1228 = vxpose.xlu0.b32.cont [4/16] 0.0, 128
        %1229 = vxpose.xlu0.b32.cont [5/16] 0.0, 128
        %1230 = vxpose.xlu0.b32.cont [6/16] 0.0, 128
        %1231 = vxpose.xlu0.b32.cont [7/16] 0.0, 128
        %1232 = vxpose.xlu0.b32.cont [8/16] 0.0, 128
        %1233 = vxpose.xlu0.b32.cont [9/16] 0.0, 128
        %1234 = vxpose.xlu0.b32.cont [10/16] 0.0, 128
        %1235 = vxpose.xlu0.b32.cont [11/16] 0.0, 128
        %1236 = vxpose.xlu0.b32.cont [12/16] 0.0, 128
        %1237 = vxpose.xlu0.b32.cont [13/16] 0.0, 128
        %1238 = vxpose.xlu0.b32.cont [14/16] 0.0, 128
        %1239 = vxpose.xlu0.b32.cont [15/16] 0.0, 128
        %1240 = vxpose.xlu0.b32.end [16/16] 0.0, 128
        %v1241 = vpop.trf.xlu0
        %v1242 = vpop.trf.xlu0
        %v1243 = vpop.trf.xlu0
        %v1244 = vpop.trf.xlu0
        %v1245 = vpop.trf.xlu0
        %v1246 = vpop.trf.xlu0
        %v1247 = vpop.trf.xlu0
        %v1248 = vpop.trf.xlu0
        %v1249 = vpop.trf.xlu0
        %v1250 = vpop.trf.xlu0
        %v1251 = vpop.trf.xlu0
        %v1252 = vpop.trf.xlu0
        %v1253 = vpop.trf.xlu0
        %v1254 = vpop.trf.xlu0
        %v1255 = vpop.trf.xlu0
        %v1256 = vpop.trf.xlu0
        %1258 = vset.pattern.permute.xlu0 0
        %1259 = vperm.xlu0 %1258, %v1241
        %v1260 = vpop.permute.xlu0 %1259
        %1263 = vset.pattern.permute.xlu0 0
        %1264 = vperm.xlu0 %1263, %v1242
        %v1265 = vpop.permute.xlu0 %1264
        %1268 = vset.pattern.permute.xlu0 0
        %1269 = vperm.xlu0 %1268, %v1243
        %v1270 = vpop.permute.xlu0 %1269
        %1273 = vset.pattern.permute.xlu0 0
        %1274 = vperm.xlu0 %1273, %v1244
        %v1275 = vpop.permute.xlu0 %1274
        %1278 = vset.pattern.permute.xlu0 0
        %1279 = vperm.xlu0 %1278, %v1245
        %v1280 = vpop.permute.xlu0 %1279
        %1283 = vset.pattern.permute.xlu0 0
        %1284 = vperm.xlu0 %1283, %v1246
        %v1285 = vpop.permute.xlu0 %1284
        %1288 = vset.pattern.permute.xlu0 0
        %1289 = vperm.xlu0 %1288, %v1247
        %v1290 = vpop.permute.xlu0 %1289
        %1293 = vset.pattern.permute.xlu0 0
        %1294 = vperm.xlu0 %1293, %v1248
        %v1295 = vpop.permute.xlu0 %1294
        %1298 = vset.pattern.permute.xlu0 0
        %1299 = vperm.xlu0 %1298, %v1249
        %v1300 = vpop.permute.xlu0 %1299
        %1303 = vset.pattern.permute.xlu0 0
        %1304 = vperm.xlu0 %1303, %v1250
        %v1305 = vpop.permute.xlu0 %1304
        %1308 = vset.pattern.permute.xlu0 0
        %1309 = vperm.xlu0 %1308, %v1251
        %v1310 = vpop.permute.xlu0 %1309
        %1313 = vset.pattern.permute.xlu0 0
        %1314 = vperm.xlu0 %1313, %v1252
        %v1315 = vpop.permute.xlu0 %1314
        %1318 = vset.pattern.permute.xlu0 0
        %1319 = vperm.xlu0 %1318, %v1253
        %v1320 = vpop.permute.xlu0 %1319
        %1323 = vset.pattern.permute.xlu0 0
        %1324 = vperm.xlu0 %1323, %v1254
        %v1325 = vpop.permute.xlu0 %1324
        %1328 = vset.pattern.permute.xlu0 0
        %1329 = vperm.xlu0 %1328, %v1255
        %v1330 = vpop.permute.xlu0 %1329
        %1333 = vset.pattern.permute.xlu0 0
        %1334 = vperm.xlu0 %1333, %v1256
        %v1335 = vpop.permute.xlu0 %1334
        %v1337 = vlaneseq
        %v1338 = vshrl.u32 %v1337, 7
        %v1339 = vsub.s32 2, %v1338
        %v1340 = vrot.slane %v1224, %v1339
        %v1341 = vsub.f32 %v1260, %v1340
        %v1342 = vsub.f32 %v1265, %v1340
        %v1343 = vsub.f32 %v1270, %v1340
        %v1344 = vsub.f32 %v1275, %v1340
        %v1345 = vsub.f32 %v1280, %v1340
        %v1346 = vsub.f32 %v1285, %v1340
        %v1347 = vsub.f32 %v1290, %v1340
        %v1348 = vsub.f32 %v1295, %v1340
        %v1349 = vsub.f32 %v1300, %v1340
        %v1350 = vsub.f32 %v1305, %v1340
        %v1351 = vsub.f32 %v1310, %v1340
        %v1352 = vsub.f32 %v1315, %v1340
        %v1353 = vsub.f32 %v1320, %v1340
        %v1354 = vsub.f32 %v1325, %v1340
        %v1355 = vsub.f32 %v1330, %v1340
        %v1356 = vsub.f32 %v1335, %v1340
        %v1357 = vand.u32 2147483647, %v1341
        %v1358 = vand.u32 2147483647, %v1342
        %v1359 = vand.u32 2147483647, %v1343
        %v1360 = vand.u32 2147483647, %v1344
        %v1361 = vand.u32 2147483647, %v1345
        %v1362 = vand.u32 2147483647, %v1346
        %v1363 = vand.u32 2147483647, %v1347
        %v1364 = vand.u32 2147483647, %v1348
        %v1365 = vand.u32 2147483647, %v1349
        %v1366 = vand.u32 2147483647, %v1350
        %v1367 = vand.u32 2147483647, %v1351
        %v1368 = vand.u32 2147483647, %v1352
        %v1369 = vand.u32 2147483647, %v1353
        %v1370 = vand.u32 2147483647, %v1354
        %v1371 = vand.u32 2147483647, %v1355
        %v1372 = vand.u32 2147483647, %v1356
        %1373 = vset.pattern.permute.xlu0 1
        %1374 = vperm.xlu0 %1373, %v1241
        %v1375 = vpop.permute.xlu0 %1374
        %1377 = vset.pattern.permute.xlu0 1
        %1378 = vperm.xlu0 %1377, %v1242
        %v1379 = vpop.permute.xlu0 %1378
        %1381 = vset.pattern.permute.xlu0 1
        %1382 = vperm.xlu0 %1381, %v1243
        %v1383 = vpop.permute.xlu0 %1382
        %1385 = vset.pattern.permute.xlu0 1
        %1386 = vperm.xlu0 %1385, %v1244
        %v1387 = vpop.permute.xlu0 %1386
        %1389 = vset.pattern.permute.xlu0 1
        %1390 = vperm.xlu0 %1389, %v1245
        %v1391 = vpop.permute.xlu0 %1390
        %1393 = vset.pattern.permute.xlu0 1
        %1394 = vperm.xlu0 %1393, %v1246
        %v1395 = vpop.permute.xlu0 %1394
        %1397 = vset.pattern.permute.xlu0 1
        %1398 = vperm.xlu0 %1397, %v1247
        %v1399 = vpop.permute.xlu0 %1398
        %1401 = vset.pattern.permute.xlu0 1
        %1402 = vperm.xlu0 %1401, %v1248
        %v1403 = vpop.permute.xlu0 %1402
        %1405 = vset.pattern.permute.xlu0 1
        %1406 = vperm.xlu0 %1405, %v1249
        %v1407 = vpop.permute.xlu0 %1406
        %1409 = vset.pattern.permute.xlu0 1
        %1410 = vperm.xlu0 %1409, %v1250
        %v1411 = vpop.permute.xlu0 %1410
        %1413 = vset.pattern.permute.xlu0 1
        %1414 = vperm.xlu0 %1413, %v1251
        %v1415 = vpop.permute.xlu0 %1414
        %1417 = vset.pattern.permute.xlu0 1
        %1418 = vperm.xlu0 %1417, %v1252
        %v1419 = vpop.permute.xlu0 %1418
        %1421 = vset.pattern.permute.xlu0 1
        %1422 = vperm.xlu0 %1421, %v1253
        %v1423 = vpop.permute.xlu0 %1422
        %1425 = vset.pattern.permute.xlu0 1
        %1426 = vperm.xlu0 %1425, %v1254
        %v1427 = vpop.permute.xlu0 %1426
        %1429 = vset.pattern.permute.xlu0 1
        %1430 = vperm.xlu0 %1429, %v1255
        %v1431 = vpop.permute.xlu0 %1430
        %1433 = vset.pattern.permute.xlu0 1
        %1434 = vperm.xlu0 %1433, %v1256
        %v1435 = vpop.permute.xlu0 %1434
        %v1437 = vlaneseq
        %v1438 = vshrl.u32 %v1437, 7
        %v1439 = vsub.s32 3, %v1438
        %v1440 = vrot.slane %v1224, %v1439
        %v1441 = vsub.f32 %v1375, %v1440
        %v1442 = vsub.f32 %v1379, %v1440
        %v1443 = vsub.f32 %v1383, %v1440
        %v1444 = vsub.f32 %v1387, %v1440
        %v1445 = vsub.f32 %v1391, %v1440
        %v1446 = vsub.f32 %v1395, %v1440
        %v1447 = vsub.f32 %v1399, %v1440
        %v1448 = vsub.f32 %v1403, %v1440
        %v1449 = vsub.f32 %v1407, %v1440
        %v1450 = vsub.f32 %v1411, %v1440
        %v1451 = vsub.f32 %v1415, %v1440
        %v1452 = vsub.f32 %v1419, %v1440
        %v1453 = vsub.f32 %v1423, %v1440
        %v1454 = vsub.f32 %v1427, %v1440
        %v1455 = vsub.f32 %v1431, %v1440
        %v1456 = vsub.f32 %v1435, %v1440
        %v1457 = vand.u32 2147483647, %v1441
        %v1458 = vand.u32 2147483647, %v1442
        %v1459 = vand.u32 2147483647, %v1443
        %v1460 = vand.u32 2147483647, %v1444
        %v1461 = vand.u32 2147483647, %v1445
        %v1462 = vand.u32 2147483647, %v1446
        %v1463 = vand.u32 2147483647, %v1447
        %v1464 = vand.u32 2147483647, %v1448
        %v1465 = vand.u32 2147483647, %v1449
        %v1466 = vand.u32 2147483647, %v1450
        %v1467 = vand.u32 2147483647, %v1451
        %v1468 = vand.u32 2147483647, %v1452
        %v1469 = vand.u32 2147483647, %v1453
        %v1470 = vand.u32 2147483647, %v1454
        %v1471 = vand.u32 2147483647, %v1455
        %v1472 = vand.u32 2147483647, %v1456
        %v1473 = vmax.f32 %v1357, %v1457
        %v1474 = vmax.f32 %v1358, %v1458
        %v1475 = vmax.f32 %v1359, %v1459
        %v1476 = vmax.f32 %v1360, %v1460
        %v1477 = vmax.f32 %v1361, %v1461
        %v1478 = vmax.f32 %v1362, %v1462
        %v1479 = vmax.f32 %v1363, %v1463
        %v1480 = vmax.f32 %v1364, %v1464
        %v1481 = vmax.f32 %v1365, %v1465
        %v1482 = vmax.f32 %v1366, %v1466
        %v1483 = vmax.f32 %v1367, %v1467
        %v1484 = vmax.f32 %v1368, %v1468
        %v1485 = vmax.f32 %v1369, %v1469
        %v1486 = vmax.f32 %v1370, %v1470
        %v1487 = vmax.f32 %v1371, %v1471
        %v1488 = vmax.f32 %v1372, %v1472
        %1489 = vrot.lane.b32.xlu0 %v1241, 1
        %v1490 = vpop.permute.xlu0 %1489
        %1491 = vrot.lane.b32.xlu0 %v1242, 1
        %v1492 = vpop.permute.xlu0 %1491
        %1493 = vrot.lane.b32.xlu0 %v1243, 1
        %v1494 = vpop.permute.xlu0 %1493
        %1495 = vrot.lane.b32.xlu0 %v1244, 1
        %v1496 = vpop.permute.xlu0 %1495
        %1497 = vrot.lane.b32.xlu0 %v1245, 1
        %v1498 = vpop.permute.xlu0 %1497
        %1499 = vrot.lane.b32.xlu0 %v1246, 1
        %v1500 = vpop.permute.xlu0 %1499
        %1501 = vrot.lane.b32.xlu0 %v1247, 1
        %v1502 = vpop.permute.xlu0 %1501
        %1503 = vrot.lane.b32.xlu0 %v1248, 1
        %v1504 = vpop.permute.xlu0 %1503
        %1505 = vrot.lane.b32.xlu0 %v1249, 1
        %v1506 = vpop.permute.xlu0 %1505
        %1507 = vrot.lane.b32.xlu0 %v1250, 1
        %v1508 = vpop.permute.xlu0 %1507
        %1509 = vrot.lane.b32.xlu0 %v1251, 1
        %v1510 = vpop.permute.xlu0 %1509
        %1511 = vrot.lane.b32.xlu0 %v1252, 1
        %v1512 = vpop.permute.xlu0 %1511
        %1513 = vrot.lane.b32.xlu0 %v1253, 1
        %v1514 = vpop.permute.xlu0 %1513
        %1515 = vrot.lane.b32.xlu0 %v1254, 1
        %v1516 = vpop.permute.xlu0 %1515
        %1517 = vrot.lane.b32.xlu0 %v1255, 1
        %v1518 = vpop.permute.xlu0 %1517
        %1519 = vrot.lane.b32.xlu0 %v1256, 1
        %v1520 = vpop.permute.xlu0 %1519
        %v1537 = vsub.f32 %v1241, %v1490
        %v1538 = vsub.f32 %v1242, %v1492
        %v1539 = vsub.f32 %v1243, %v1494
        %v1540 = vsub.f32 %v1244, %v1496
        %v1541 = vsub.f32 %v1245, %v1498
        %v1542 = vsub.f32 %v1246, %v1500
        %v1543 = vsub.f32 %v1247, %v1502
        %v1544 = vsub.f32 %v1248, %v1504
        %v1545 = vsub.f32 %v1249, %v1506
        %v1546 = vsub.f32 %v1250, %v1508
        %v1547 = vsub.f32 %v1251, %v1510
        %v1548 = vsub.f32 %v1252, %v1512
        %v1549 = vsub.f32 %v1253, %v1514
        %v1550 = vsub.f32 %v1254, %v1516
        %v1551 = vsub.f32 %v1255, %v1518
        %v1552 = vsub.f32 %v1256, %v1520
        %v1553 = vand.u32 2147483647, %v1537
        %v1554 = vand.u32 2147483647, %v1538
        %v1555 = vand.u32 2147483647, %v1539
        %v1556 = vand.u32 2147483647, %v1540
        %v1557 = vand.u32 2147483647, %v1541
        %v1558 = vand.u32 2147483647, %v1542
        %v1559 = vand.u32 2147483647, %v1543
        %v1560 = vand.u32 2147483647, %v1544
        %v1561 = vand.u32 2147483647, %v1545
        %v1562 = vand.u32 2147483647, %v1546
        %v1563 = vand.u32 2147483647, %v1547
        %v1564 = vand.u32 2147483647, %v1548
        %v1565 = vand.u32 2147483647, %v1549
        %v1566 = vand.u32 2147483647, %v1550
        %v1567 = vand.u32 2147483647, %v1551
        %v1568 = vand.u32 2147483647, %v1552
        %v1569 = vmul.f32 %v1553, 0.5
        %v1570 = vmul.f32 %v1554, 0.5
        %v1571 = vmul.f32 %v1555, 0.5
        %v1572 = vmul.f32 %v1556, 0.5
        %v1573 = vmul.f32 %v1557, 0.5
        %v1574 = vmul.f32 %v1558, 0.5
        %v1575 = vmul.f32 %v1559, 0.5
        %v1576 = vmul.f32 %v1560, 0.5
        %v1577 = vmul.f32 %v1561, 0.5
        %v1578 = vmul.f32 %v1562, 0.5
        %v1579 = vmul.f32 %v1563, 0.5
        %v1580 = vmul.f32 %v1564, 0.5
        %v1581 = vmul.f32 %v1565, 0.5
        %v1582 = vmul.f32 %v1566, 0.5
        %v1583 = vmul.f32 %v1567, 0.5
        %v1584 = vmul.f32 %v1568, 0.5
        %v1586 = vrot.slane %v1224, 7
        %v1588 = vsub.f32 %v1224, %v1586
        %v1589 = vand.u32 2147483647, %v1588
        %v1590 = vmul.f32 %v1589, 0.5
        %v1591 = vlaneseq
        %v1592 = vshrl.u32 %v1591, 7
        %v1593 = vsub.s32 3, %v1592
        %v1594 = vrot.slane %v1590, %v1593
        %v1595 = vsel %vm172, %v1594, 0.0
        %1597 = vset.pattern.permute.xlu0 1
        %1598 = vperm.xlu0 %1597, %v1569
        %v1599 = vpop.permute.xlu0 %1598
        %1602 = vset.pattern.permute.xlu0 1
        %1603 = vperm.xlu0 %1602, %v1570
        %v1604 = vpop.permute.xlu0 %1603
        %1607 = vset.pattern.permute.xlu0 1
        %1608 = vperm.xlu0 %1607, %v1571
        %v1609 = vpop.permute.xlu0 %1608
        %1612 = vset.pattern.permute.xlu0 1
        %1613 = vperm.xlu0 %1612, %v1572
        %v1614 = vpop.permute.xlu0 %1613
        %1617 = vset.pattern.permute.xlu0 1
        %1618 = vperm.xlu0 %1617, %v1573
        %v1619 = vpop.permute.xlu0 %1618
        %1622 = vset.pattern.permute.xlu0 1
        %1623 = vperm.xlu0 %1622, %v1574
        %v1624 = vpop.permute.xlu0 %1623
        %1627 = vset.pattern.permute.xlu0 1
        %1628 = vperm.xlu0 %1627, %v1575
        %v1629 = vpop.permute.xlu0 %1628
        %1632 = vset.pattern.permute.xlu0 1
        %1633 = vperm.xlu0 %1632, %v1576
        %v1634 = vpop.permute.xlu0 %1633
        %1637 = vset.pattern.permute.xlu0 1
        %1638 = vperm.xlu0 %1637, %v1577
        %v1639 = vpop.permute.xlu0 %1638
        %1642 = vset.pattern.permute.xlu0 1
        %1643 = vperm.xlu0 %1642, %v1578
        %v1644 = vpop.permute.xlu0 %1643
        %1647 = vset.pattern.permute.xlu0 1
        %1648 = vperm.xlu0 %1647, %v1579
        %v1649 = vpop.permute.xlu0 %1648
        %1652 = vset.pattern.permute.xlu0 1
        %1653 = vperm.xlu0 %1652, %v1580
        %v1654 = vpop.permute.xlu0 %1653
        %1657 = vset.pattern.permute.xlu0 1
        %1658 = vperm.xlu0 %1657, %v1581
        %v1659 = vpop.permute.xlu0 %1658
        %1662 = vset.pattern.permute.xlu0 1
        %1663 = vperm.xlu0 %1662, %v1582
        %v1664 = vpop.permute.xlu0 %1663
        %1667 = vset.pattern.permute.xlu0 1
        %1668 = vperm.xlu0 %1667, %v1583
        %v1669 = vpop.permute.xlu0 %1668
        %1672 = vset.pattern.permute.xlu0 1
        %1673 = vperm.xlu0 %1672, %v1584
        %v1674 = vpop.permute.xlu0 %1673
        %v1676 = vsel %vm156, %v1599, %v1595
        %v1677 = vsel %vm157, %v1604, %v1595
        %v1678 = vsel %vm158, %v1609, %v1595
        %v1679 = vsel %vm159, %v1614, %v1595
        %v1680 = vsel %vm160, %v1619, %v1595
        %v1681 = vsel %vm161, %v1624, %v1595
        %v1682 = vsel %vm162, %v1629, %v1595
        %v1683 = vsel %vm163, %v1634, %v1595
        %v1684 = vsel %vm164, %v1639, %v1595
        %v1685 = vsel %vm165, %v1644, %v1595
        %v1686 = vsel %vm166, %v1649, %v1595
        %v1687 = vsel %vm167, %v1654, %v1595
        %v1688 = vsel %vm168, %v1659, %v1595
        %v1689 = vsel %vm169, %v1664, %v1595
        %v1690 = vsel %vm170, %v1669, %v1595
        %v1691 = vsel %vm171, %v1674, %v1595
        %v1692 = vsel %vm540, %v1473, %v1676
        %v1693 = vsel %vm541, %v1474, %v1677
        %v1694 = vsel %vm542, %v1475, %v1678
        %v1695 = vsel %vm543, %v1476, %v1679
        %v1696 = vsel %vm544, %v1477, %v1680
        %v1697 = vsel %vm545, %v1478, %v1681
        %v1698 = vsel %vm546, %v1479, %v1682
        %v1699 = vsel %vm547, %v1480, %v1683
        %v1700 = vsel %vm548, %v1481, %v1684
        %v1701 = vsel %vm549, %v1482, %v1685
        %v1702 = vsel %vm550, %v1483, %v1686
        %v1703 = vsel %vm551, %v1484, %v1687
        %v1704 = vsel %vm552, %v1485, %v1688
        %v1705 = vsel %vm553, %v1486, %v1689
        %v1706 = vsel %vm554, %v1487, %v1690
        %v1707 = vsel %vm555, %v1488, %v1691
        %v1708 = vmul.f32 %v1692, %v1692
        %v1709 = vmul.f32 %v1693, %v1693
        %v1710 = vmul.f32 %v1694, %v1694
        %v1711 = vmul.f32 %v1695, %v1695
        %v1712 = vmul.f32 %v1696, %v1696
        %v1713 = vmul.f32 %v1697, %v1697
        %v1714 = vmul.f32 %v1698, %v1698
        %v1715 = vmul.f32 %v1699, %v1699
        %v1716 = vmul.f32 %v1700, %v1700
        %v1717 = vmul.f32 %v1701, %v1701
        %v1718 = vmul.f32 %v1702, %v1702
        %v1719 = vmul.f32 %v1703, %v1703
        %v1720 = vmul.f32 %v1704, %v1704
        %v1721 = vmul.f32 %v1705, %v1705
        %v1722 = vmul.f32 %v1706, %v1706
        %v1723 = vmul.f32 %v1707, %v1707
        %s1724 = scalar_lea.vmem %s134, 256 [#allocation5]
        %1725 = vst [vmem:[%s1724] sm:$0xff] %v1708
        %1726 = vst [vmem:[%s1724 + $0x8] sm:$0xff] %v1709
        %1727 = vst [vmem:[%s1724 + $0x10] sm:$0xff] %v1710
        %1728 = vst [vmem:[%s1724 + $0x18] sm:$0xff] %v1711
        %1729 = vst [vmem:[%s1724 + $0x20] sm:$0xff] %v1712
        %1730 = vst [vmem:[%s1724 + $0x28] sm:$0xff] %v1713
        %1731 = vst [vmem:[%s1724 + $0x30] sm:$0xff] %v1714
        %1732 = vst [vmem:[%s1724 + $0x38] sm:$0xff] %v1715
        %1733 = vst [vmem:[%s1724 + $0x40] sm:$0xff] %v1716
        %1734 = vst [vmem:[%s1724 + $0x48] sm:$0xff] %v1717
        %1735 = vst [vmem:[%s1724 + $0x50] sm:$0xff] %v1718
        %1736 = vst [vmem:[%s1724 + $0x58] sm:$0xff] %v1719
        %1737 = vst [vmem:[%s1724 + $0x60] sm:$0xff] %v1720
        %1738 = vst [vmem:[%s1724 + $0x68] sm:$0xff] %v1721
        %1739 = vst [vmem:[%s1724 + $0x70] sm:$0xff] %v1722
        %1740 = vst [vmem:[%s1724 + $0x78] sm:$0xff] %v1723
        %s1741 = scalar_lea.vmem %s116, 24 [#allocation2]
        %v1742 = vld [vmem:[%s1741] sm:$0xff]
        %1743 = vxpose.xlu0.b32.start [1/16] %v1742, 128
        %1744 = vxpose.xlu0.b32.cont [2/16] 0.0, 128
        %1745 = vxpose.xlu0.b32.cont [3/16] 0.0, 128
        %1746 = vxpose.xlu0.b32.cont [4/16] 0.0, 128
        %1747 = vxpose.xlu0.b32.cont [5/16] 0.0, 128
        %1748 = vxpose.xlu0.b32.cont [6/16] 0.0, 128
        %1749 = vxpose.xlu0.b32.cont [7/16] 0.0, 128
        %1750 = vxpose.xlu0.b32.cont [8/16] 0.0, 128
        %1751 = vxpose.xlu0.b32.cont [9/16] 0.0, 128
        %1752 = vxpose.xlu0.b32.cont [10/16] 0.0, 128
        %1753 = vxpose.xlu0.b32.cont [11/16] 0.0, 128
        %1754 = vxpose.xlu0.b32.cont [12/16] 0.0, 128
        %1755 = vxpose.xlu0.b32.cont [13/16] 0.0, 128
        %1756 = vxpose.xlu0.b32.cont [14/16] 0.0, 128
        %1757 = vxpose.xlu0.b32.cont [15/16] 0.0, 128
        %1758 = vxpose.xlu0.b32.end [16/16] 0.0, 128
        %v1759 = vpop.trf.xlu0
        %v1760 = vpop.trf.xlu0
        %v1761 = vpop.trf.xlu0
        %v1762 = vpop.trf.xlu0
        %v1763 = vpop.trf.xlu0
        %v1764 = vpop.trf.xlu0
        %v1765 = vpop.trf.xlu0
        %v1766 = vpop.trf.xlu0
        %v1767 = vpop.trf.xlu0
        %v1768 = vpop.trf.xlu0
        %v1769 = vpop.trf.xlu0
        %v1770 = vpop.trf.xlu0
        %v1771 = vpop.trf.xlu0
        %v1772 = vpop.trf.xlu0
        %v1773 = vpop.trf.xlu0
        %v1774 = vpop.trf.xlu0
        %1776 = vset.pattern.permute.xlu0 0
        %1777 = vperm.xlu0 %1776, %v1759
        %v1778 = vpop.permute.xlu0 %1777
        %1781 = vset.pattern.permute.xlu0 0
        %1782 = vperm.xlu0 %1781, %v1760
        %v1783 = vpop.permute.xlu0 %1782
        %1786 = vset.pattern.permute.xlu0 0
        %1787 = vperm.xlu0 %1786, %v1761
        %v1788 = vpop.permute.xlu0 %1787
        %1791 = vset.pattern.permute.xlu0 0
        %1792 = vperm.xlu0 %1791, %v1762
        %v1793 = vpop.permute.xlu0 %1792
        %1796 = vset.pattern.permute.xlu0 0
        %1797 = vperm.xlu0 %1796, %v1763
        %v1798 = vpop.permute.xlu0 %1797
        %1801 = vset.pattern.permute.xlu0 0
        %1802 = vperm.xlu0 %1801, %v1764
        %v1803 = vpop.permute.xlu0 %1802
        %1806 = vset.pattern.permute.xlu0 0
        %1807 = vperm.xlu0 %1806, %v1765
        %v1808 = vpop.permute.xlu0 %1807
        %1811 = vset.pattern.permute.xlu0 0
        %1812 = vperm.xlu0 %1811, %v1766
        %v1813 = vpop.permute.xlu0 %1812
        %1816 = vset.pattern.permute.xlu0 0
        %1817 = vperm.xlu0 %1816, %v1767
        %v1818 = vpop.permute.xlu0 %1817
        %1821 = vset.pattern.permute.xlu0 0
        %1822 = vperm.xlu0 %1821, %v1768
        %v1823 = vpop.permute.xlu0 %1822
        %1826 = vset.pattern.permute.xlu0 0
        %1827 = vperm.xlu0 %1826, %v1769
        %v1828 = vpop.permute.xlu0 %1827
        %1831 = vset.pattern.permute.xlu0 0
        %1832 = vperm.xlu0 %1831, %v1770
        %v1833 = vpop.permute.xlu0 %1832
        %1836 = vset.pattern.permute.xlu0 0
        %1837 = vperm.xlu0 %1836, %v1771
        %v1838 = vpop.permute.xlu0 %1837
        %1841 = vset.pattern.permute.xlu0 0
        %1842 = vperm.xlu0 %1841, %v1772
        %v1843 = vpop.permute.xlu0 %1842
        %1846 = vset.pattern.permute.xlu0 0
        %1847 = vperm.xlu0 %1846, %v1773
        %v1848 = vpop.permute.xlu0 %1847
        %1851 = vset.pattern.permute.xlu0 0
        %1852 = vperm.xlu0 %1851, %v1774
        %v1853 = vpop.permute.xlu0 %1852
        %v1855 = vlaneseq
        %v1856 = vshrl.u32 %v1855, 7
        %v1857 = vsub.s32 2, %v1856
        %v1858 = vrot.slane %v1742, %v1857
        %v1859 = vsub.f32 %v1778, %v1858
        %v1860 = vsub.f32 %v1783, %v1858
        %v1861 = vsub.f32 %v1788, %v1858
        %v1862 = vsub.f32 %v1793, %v1858
        %v1863 = vsub.f32 %v1798, %v1858
        %v1864 = vsub.f32 %v1803, %v1858
        %v1865 = vsub.f32 %v1808, %v1858
        %v1866 = vsub.f32 %v1813, %v1858
        %v1867 = vsub.f32 %v1818, %v1858
        %v1868 = vsub.f32 %v1823, %v1858
        %v1869 = vsub.f32 %v1828, %v1858
        %v1870 = vsub.f32 %v1833, %v1858
        %v1871 = vsub.f32 %v1838, %v1858
        %v1872 = vsub.f32 %v1843, %v1858
        %v1873 = vsub.f32 %v1848, %v1858
        %v1874 = vsub.f32 %v1853, %v1858
        %v1875 = vand.u32 2147483647, %v1859
        %v1876 = vand.u32 2147483647, %v1860
        %v1877 = vand.u32 2147483647, %v1861
        %v1878 = vand.u32 2147483647, %v1862
        %v1879 = vand.u32 2147483647, %v1863
        %v1880 = vand.u32 2147483647, %v1864
        %v1881 = vand.u32 2147483647, %v1865
        %v1882 = vand.u32 2147483647, %v1866
        %v1883 = vand.u32 2147483647, %v1867
        %v1884 = vand.u32 2147483647, %v1868
        %v1885 = vand.u32 2147483647, %v1869
        %v1886 = vand.u32 2147483647, %v1870
        %v1887 = vand.u32 2147483647, %v1871
        %v1888 = vand.u32 2147483647, %v1872
        %v1889 = vand.u32 2147483647, %v1873
        %v1890 = vand.u32 2147483647, %v1874
        %1891 = vset.pattern.permute.xlu0 1
        %1892 = vperm.xlu0 %1891, %v1759
        %v1893 = vpop.permute.xlu0 %1892
        %1895 = vset.pattern.permute.xlu0 1
        %1896 = vperm.xlu0 %1895, %v1760
        %v1897 = vpop.permute.xlu0 %1896
        %1899 = vset.pattern.permute.xlu0 1
        %1900 = vperm.xlu0 %1899, %v1761
        %v1901 = vpop.permute.xlu0 %1900
        %1903 = vset.pattern.permute.xlu0 1
        %1904 = vperm.xlu0 %1903, %v1762
        %v1905 = vpop.permute.xlu0 %1904
        %1907 = vset.pattern.permute.xlu0 1
        %1908 = vperm.xlu0 %1907, %v1763
        %v1909 = vpop.permute.xlu0 %1908
        %1911 = vset.pattern.permute.xlu0 1
        %1912 = vperm.xlu0 %1911, %v1764
        %v1913 = vpop.permute.xlu0 %1912
        %1915 = vset.pattern.permute.xlu0 1
        %1916 = vperm.xlu0 %1915, %v1765
        %v1917 = vpop.permute.xlu0 %1916
        %1919 = vset.pattern.permute.xlu0 1
        %1920 = vperm.xlu0 %1919, %v1766
        %v1921 = vpop.permute.xlu0 %1920
        %1923 = vset.pattern.permute.xlu0 1
        %1924 = vperm.xlu0 %1923, %v1767
        %v1925 = vpop.permute.xlu0 %1924
        %1927 = vset.pattern.permute.xlu0 1
        %1928 = vperm.xlu0 %1927, %v1768
        %v1929 = vpop.permute.xlu0 %1928
        %1931 = vset.pattern.permute.xlu0 1
        %1932 = vperm.xlu0 %1931, %v1769
        %v1933 = vpop.permute.xlu0 %1932
        %1935 = vset.pattern.permute.xlu0 1
        %1936 = vperm.xlu0 %1935, %v1770
        %v1937 = vpop.permute.xlu0 %1936
        %1939 = vset.pattern.permute.xlu0 1
        %1940 = vperm.xlu0 %1939, %v1771
        %v1941 = vpop.permute.xlu0 %1940
        %1943 = vset.pattern.permute.xlu0 1
        %1944 = vperm.xlu0 %1943, %v1772
        %v1945 = vpop.permute.xlu0 %1944
        %1947 = vset.pattern.permute.xlu0 1
        %1948 = vperm.xlu0 %1947, %v1773
        %v1949 = vpop.permute.xlu0 %1948
        %1951 = vset.pattern.permute.xlu0 1
        %1952 = vperm.xlu0 %1951, %v1774
        %v1953 = vpop.permute.xlu0 %1952
        %v1955 = vlaneseq
        %v1956 = vshrl.u32 %v1955, 7
        %v1957 = vsub.s32 3, %v1956
        %v1958 = vrot.slane %v1742, %v1957
        %v1959 = vsub.f32 %v1893, %v1958
        %v1960 = vsub.f32 %v1897, %v1958
        %v1961 = vsub.f32 %v1901, %v1958
        %v1962 = vsub.f32 %v1905, %v1958
        %v1963 = vsub.f32 %v1909, %v1958
        %v1964 = vsub.f32 %v1913, %v1958
        %v1965 = vsub.f32 %v1917, %v1958
        %v1966 = vsub.f32 %v1921, %v1958
        %v1967 = vsub.f32 %v1925, %v1958
        %v1968 = vsub.f32 %v1929, %v1958
        %v1969 = vsub.f32 %v1933, %v1958
        %v1970 = vsub.f32 %v1937, %v1958
        %v1971 = vsub.f32 %v1941, %v1958
        %v1972 = vsub.f32 %v1945, %v1958
        %v1973 = vsub.f32 %v1949, %v1958
        %v1974 = vsub.f32 %v1953, %v1958
        %v1975 = vand.u32 2147483647, %v1959
        %v1976 = vand.u32 2147483647, %v1960
        %v1977 = vand.u32 2147483647, %v1961
        %v1978 = vand.u32 2147483647, %v1962
        %v1979 = vand.u32 2147483647, %v1963
        %v1980 = vand.u32 2147483647, %v1964
        %v1981 = vand.u32 2147483647, %v1965
        %v1982 = vand.u32 2147483647, %v1966
        %v1983 = vand.u32 2147483647, %v1967
        %v1984 = vand.u32 2147483647, %v1968
        %v1985 = vand.u32 2147483647, %v1969
        %v1986 = vand.u32 2147483647, %v1970
        %v1987 = vand.u32 2147483647, %v1971
        %v1988 = vand.u32 2147483647, %v1972
        %v1989 = vand.u32 2147483647, %v1973
        %v1990 = vand.u32 2147483647, %v1974
        %v1991 = vmax.f32 %v1875, %v1975
        %v1992 = vmax.f32 %v1876, %v1976
        %v1993 = vmax.f32 %v1877, %v1977
        %v1994 = vmax.f32 %v1878, %v1978
        %v1995 = vmax.f32 %v1879, %v1979
        %v1996 = vmax.f32 %v1880, %v1980
        %v1997 = vmax.f32 %v1881, %v1981
        %v1998 = vmax.f32 %v1882, %v1982
        %v1999 = vmax.f32 %v1883, %v1983
        %v2000 = vmax.f32 %v1884, %v1984
        %v2001 = vmax.f32 %v1885, %v1985
        %v2002 = vmax.f32 %v1886, %v1986
        %v2003 = vmax.f32 %v1887, %v1987
        %v2004 = vmax.f32 %v1888, %v1988
        %v2005 = vmax.f32 %v1889, %v1989
        %v2006 = vmax.f32 %v1890, %v1990
        %2007 = vrot.lane.b32.xlu0 %v1759, 1
        %v2008 = vpop.permute.xlu0 %2007
        %2009 = vrot.lane.b32.xlu0 %v1760, 1
        %v2010 = vpop.permute.xlu0 %2009
        %2011 = vrot.lane.b32.xlu0 %v1761, 1
        %v2012 = vpop.permute.xlu0 %2011
        %2013 = vrot.lane.b32.xlu0 %v1762, 1
        %v2014 = vpop.permute.xlu0 %2013
        %2015 = vrot.lane.b32.xlu0 %v1763, 1
        %v2016 = vpop.permute.xlu0 %2015
        %2017 = vrot.lane.b32.xlu0 %v1764, 1
        %v2018 = vpop.permute.xlu0 %2017
        %2019 = vrot.lane.b32.xlu0 %v1765, 1
        %v2020 = vpop.permute.xlu0 %2019
        %2021 = vrot.lane.b32.xlu0 %v1766, 1
        %v2022 = vpop.permute.xlu0 %2021
        %2023 = vrot.lane.b32.xlu0 %v1767, 1
        %v2024 = vpop.permute.xlu0 %2023
        %2025 = vrot.lane.b32.xlu0 %v1768, 1
        %v2026 = vpop.permute.xlu0 %2025
        %2027 = vrot.lane.b32.xlu0 %v1769, 1
        %v2028 = vpop.permute.xlu0 %2027
        %2029 = vrot.lane.b32.xlu0 %v1770, 1
        %v2030 = vpop.permute.xlu0 %2029
        %2031 = vrot.lane.b32.xlu0 %v1771, 1
        %v2032 = vpop.permute.xlu0 %2031
        %2033 = vrot.lane.b32.xlu0 %v1772, 1
        %v2034 = vpop.permute.xlu0 %2033
        %2035 = vrot.lane.b32.xlu0 %v1773, 1
        %v2036 = vpop.permute.xlu0 %2035
        %2037 = vrot.lane.b32.xlu0 %v1774, 1
        %v2038 = vpop.permute.xlu0 %2037
        %v2055 = vsub.f32 %v1759, %v2008
        %v2056 = vsub.f32 %v1760, %v2010
        %v2057 = vsub.f32 %v1761, %v2012
        %v2058 = vsub.f32 %v1762, %v2014
        %v2059 = vsub.f32 %v1763, %v2016
        %v2060 = vsub.f32 %v1764, %v2018
        %v2061 = vsub.f32 %v1765, %v2020
        %v2062 = vsub.f32 %v1766, %v2022
        %v2063 = vsub.f32 %v1767, %v2024
        %v2064 = vsub.f32 %v1768, %v2026
        %v2065 = vsub.f32 %v1769, %v2028
        %v2066 = vsub.f32 %v1770, %v2030
        %v2067 = vsub.f32 %v1771, %v2032
        %v2068 = vsub.f32 %v1772, %v2034
        %v2069 = vsub.f32 %v1773, %v2036
        %v2070 = vsub.f32 %v1774, %v2038
        %v2071 = vand.u32 2147483647, %v2055
        %v2072 = vand.u32 2147483647, %v2056
        %v2073 = vand.u32 2147483647, %v2057
        %v2074 = vand.u32 2147483647, %v2058
        %v2075 = vand.u32 2147483647, %v2059
        %v2076 = vand.u32 2147483647, %v2060
        %v2077 = vand.u32 2147483647, %v2061
        %v2078 = vand.u32 2147483647, %v2062
        %v2079 = vand.u32 2147483647, %v2063
        %v2080 = vand.u32 2147483647, %v2064
        %v2081 = vand.u32 2147483647, %v2065
        %v2082 = vand.u32 2147483647, %v2066
        %v2083 = vand.u32 2147483647, %v2067
        %v2084 = vand.u32 2147483647, %v2068
        %v2085 = vand.u32 2147483647, %v2069
        %v2086 = vand.u32 2147483647, %v2070
        %v2087 = vmul.f32 %v2071, 0.5
        %v2088 = vmul.f32 %v2072, 0.5
        %v2089 = vmul.f32 %v2073, 0.5
        %v2090 = vmul.f32 %v2074, 0.5
        %v2091 = vmul.f32 %v2075, 0.5
        %v2092 = vmul.f32 %v2076, 0.5
        %v2093 = vmul.f32 %v2077, 0.5
        %v2094 = vmul.f32 %v2078, 0.5
        %v2095 = vmul.f32 %v2079, 0.5
        %v2096 = vmul.f32 %v2080, 0.5
        %v2097 = vmul.f32 %v2081, 0.5
        %v2098 = vmul.f32 %v2082, 0.5
        %v2099 = vmul.f32 %v2083, 0.5
        %v2100 = vmul.f32 %v2084, 0.5
        %v2101 = vmul.f32 %v2085, 0.5
        %v2102 = vmul.f32 %v2086, 0.5
        %v2104 = vrot.slane %v1742, 7
        %v2106 = vsub.f32 %v1742, %v2104
        %v2107 = vand.u32 2147483647, %v2106
        %v2108 = vmul.f32 %v2107, 0.5
        %v2109 = vlaneseq
        %v2110 = vshrl.u32 %v2109, 7
        %v2111 = vsub.s32 3, %v2110
        %v2112 = vrot.slane %v2108, %v2111
        %v2113 = vsel %vm172, %v2112, 0.0
        %2115 = vset.pattern.permute.xlu0 1
        %2116 = vperm.xlu0 %2115, %v2087
        %v2117 = vpop.permute.xlu0 %2116
        %2120 = vset.pattern.permute.xlu0 1
        %2121 = vperm.xlu0 %2120, %v2088
        %v2122 = vpop.permute.xlu0 %2121
        %2125 = vset.pattern.permute.xlu0 1
        %2126 = vperm.xlu0 %2125, %v2089
        %v2127 = vpop.permute.xlu0 %2126
        %2130 = vset.pattern.permute.xlu0 1
        %2131 = vperm.xlu0 %2130, %v2090
        %v2132 = vpop.permute.xlu0 %2131
        %2135 = vset.pattern.permute.xlu0 1
        %2136 = vperm.xlu0 %2135, %v2091
        %v2137 = vpop.permute.xlu0 %2136
        %2140 = vset.pattern.permute.xlu0 1
        %2141 = vperm.xlu0 %2140, %v2092
        %v2142 = vpop.permute.xlu0 %2141
        %2145 = vset.pattern.permute.xlu0 1
        %2146 = vperm.xlu0 %2145, %v2093
        %v2147 = vpop.permute.xlu0 %2146
        %2150 = vset.pattern.permute.xlu0 1
        %2151 = vperm.xlu0 %2150, %v2094
        %v2152 = vpop.permute.xlu0 %2151
        %2155 = vset.pattern.permute.xlu0 1
        %2156 = vperm.xlu0 %2155, %v2095
        %v2157 = vpop.permute.xlu0 %2156
        %2160 = vset.pattern.permute.xlu0 1
        %2161 = vperm.xlu0 %2160, %v2096
        %v2162 = vpop.permute.xlu0 %2161
        %2165 = vset.pattern.permute.xlu0 1
        %2166 = vperm.xlu0 %2165, %v2097
        %v2167 = vpop.permute.xlu0 %2166
        %2170 = vset.pattern.permute.xlu0 1
        %2171 = vperm.xlu0 %2170, %v2098
        %v2172 = vpop.permute.xlu0 %2171
        %2175 = vset.pattern.permute.xlu0 1
        %2176 = vperm.xlu0 %2175, %v2099
        %v2177 = vpop.permute.xlu0 %2176
        %2180 = vset.pattern.permute.xlu0 1
        %2181 = vperm.xlu0 %2180, %v2100
        %v2182 = vpop.permute.xlu0 %2181
        %2185 = vset.pattern.permute.xlu0 1
        %2186 = vperm.xlu0 %2185, %v2101
        %v2187 = vpop.permute.xlu0 %2186
        %2190 = vset.pattern.permute.xlu0 1
        %2191 = vperm.xlu0 %2190, %v2102
        %v2192 = vpop.permute.xlu0 %2191
        %v2194 = vsel %vm156, %v2117, %v2113
        %v2195 = vsel %vm157, %v2122, %v2113
        %v2196 = vsel %vm158, %v2127, %v2113
        %v2197 = vsel %vm159, %v2132, %v2113
        %v2198 = vsel %vm160, %v2137, %v2113
        %v2199 = vsel %vm161, %v2142, %v2113
        %v2200 = vsel %vm162, %v2147, %v2113
        %v2201 = vsel %vm163, %v2152, %v2113
        %v2202 = vsel %vm164, %v2157, %v2113
        %v2203 = vsel %vm165, %v2162, %v2113
        %v2204 = vsel %vm166, %v2167, %v2113
        %v2205 = vsel %vm167, %v2172, %v2113
        %v2206 = vsel %vm168, %v2177, %v2113
        %v2207 = vsel %vm169, %v2182, %v2113
        %v2208 = vsel %vm170, %v2187, %v2113
        %v2209 = vsel %vm171, %v2192, %v2113
        %v2210 = vsel %vm540, %v1991, %v2194
        %v2211 = vsel %vm541, %v1992, %v2195
        %v2212 = vsel %vm542, %v1993, %v2196
        %v2213 = vsel %vm543, %v1994, %v2197
        %v2214 = vsel %vm544, %v1995, %v2198
        %v2215 = vsel %vm545, %v1996, %v2199
        %v2216 = vsel %vm546, %v1997, %v2200
        %v2217 = vsel %vm547, %v1998, %v2201
        %v2218 = vsel %vm548, %v1999, %v2202
        %v2219 = vsel %vm549, %v2000, %v2203
        %v2220 = vsel %vm550, %v2001, %v2204
        %v2221 = vsel %vm551, %v2002, %v2205
        %v2222 = vsel %vm552, %v2003, %v2206
        %v2223 = vsel %vm553, %v2004, %v2207
        %v2224 = vsel %vm554, %v2005, %v2208
        %v2225 = vsel %vm555, %v2006, %v2209
        %v2226 = vmul.f32 %v2210, %v2210
        %v2227 = vmul.f32 %v2211, %v2211
        %v2228 = vmul.f32 %v2212, %v2212
        %v2229 = vmul.f32 %v2213, %v2213
        %v2230 = vmul.f32 %v2214, %v2214
        %v2231 = vmul.f32 %v2215, %v2215
        %v2232 = vmul.f32 %v2216, %v2216
        %v2233 = vmul.f32 %v2217, %v2217
        %v2234 = vmul.f32 %v2218, %v2218
        %v2235 = vmul.f32 %v2219, %v2219
        %v2236 = vmul.f32 %v2220, %v2220
        %v2237 = vmul.f32 %v2221, %v2221
        %v2238 = vmul.f32 %v2222, %v2222
        %v2239 = vmul.f32 %v2223, %v2223
        %v2240 = vmul.f32 %v2224, %v2224
        %v2241 = vmul.f32 %v2225, %v2225
        %s2242 = scalar_lea.vmem %s134, 384 [#allocation5]
        %2243 = vst [vmem:[%s2242] sm:$0xff] %v2226
        %2244 = vst [vmem:[%s2242 + $0x8] sm:$0xff] %v2227
        %2245 = vst [vmem:[%s2242 + $0x10] sm:$0xff] %v2228
        %2246 = vst [vmem:[%s2242 + $0x18] sm:$0xff] %v2229
        %2247 = vst [vmem:[%s2242 + $0x20] sm:$0xff] %v2230
        %2248 = vst [vmem:[%s2242 + $0x28] sm:$0xff] %v2231
        %2249 = vst [vmem:[%s2242 + $0x30] sm:$0xff] %v2232
        %2250 = vst [vmem:[%s2242 + $0x38] sm:$0xff] %v2233
        %2251 = vst [vmem:[%s2242 + $0x40] sm:$0xff] %v2234
        %2252 = vst [vmem:[%s2242 + $0x48] sm:$0xff] %v2235
        %2253 = vst [vmem:[%s2242 + $0x50] sm:$0xff] %v2236
        %2254 = vst [vmem:[%s2242 + $0x58] sm:$0xff] %v2237
        %2255 = vst [vmem:[%s2242 + $0x60] sm:$0xff] %v2238
        %2256 = vst [vmem:[%s2242 + $0x68] sm:$0xff] %v2239
        %2257 = vst [vmem:[%s2242 + $0x70] sm:$0xff] %v2240
        %2258 = vst [vmem:[%s2242 + $0x78] sm:$0xff] %v2241
        %s2259 = sand.u32 %s52, 1
        %s2260 = scalar_lea.sflag [#allocation4], %s2259
        %s2261 = sand.u32 %s52, 1
        %s2262 = smul.addr %s2261, 512
        %s2263 = scalar_lea.vmem [#allocation5], %s2262
        // Predicated region
        $region29: #{tpu_custom_call.1} parent=23 // pred_check
          %p2264 = pneg %p62
        $region30: #{tpu_custom_call.1} parent=23 // pred_check_branch
          %2266 = sbr.rel (%p2264) target = $region32
        $region31: #{tpu_custom_call.1} parent=23 // pred_region
          %s2267 = smul.u32 4, %s18
          %s2269 = ssub.s32 8192, 8192
          %2270 = vsyncadd %s2260, %s2269
          %s2271 = smul.addr %s2267, 16
          %s2272 = smul.addr %s2271, 128
          %s2273 = scalar_lea.hbm %s1, %s2272
          %s2274 = sshll.u32 %s2263, 4
          %s2275 = int_to_ptr.vmem [resolvable:$true] %s2274
          %2280 = dma.vmem_to_hbm [thread:$0]  %s2275, 8192, %s2273, %s2260, 128, 128, 8
        $region32: #{tpu_custom_call.1} parent=23 // pred_fallthru
          _
      $region24: #{tpu_custom_call.1} parent=5 // pred_fallthru
        _
      %p2281 = scmp.le.s32.totalorder 2, %s13
      // Predicated region
      $region33: #{tpu_custom_call.1} parent=5 // pred_check
        %p2282 = pneg %p2281
      $region34: #{tpu_custom_call.1} parent=5 // pred_check_branch
        %2284 = sbr.rel (%p2282) target = $region36
      $region35: #{tpu_custom_call.1} parent=5 // pred_region
        %s2285 = ssub.s32 %s13, 2
        // Predicated region
        $region37: #{tpu_custom_call.1} parent=35 // pred_check
          %p2286 = pneg %p68
        $region38: #{tpu_custom_call.1} parent=35 // pred_check_branch
          %2288 = sbr.rel (%p2286) target = $region40
        $region39: #{tpu_custom_call.1} parent=35 // pred_region
          %s2289 = sand.u32 %s53, 1
          %s2290 = scalar_lea.sflag [#allocation4], %s2289
          %s2291 = sand.u32 %s53, 1
          %s2292 = smul.addr %s2291, 512
          %s2293 = scalar_lea.vmem [#allocation5], %s2292
          %2294 = dma.done %s2290, 8192
        $region40: #{tpu_custom_call.1} parent=35 // pred_fallthru
          _
      $region36: #{tpu_custom_call.1} parent=5 // pred_fallthru
        _
    $region6: #{tpu_custom_call.1} parent=1 // loop_footer
      %s17 = sadd.s32 1, %s13
    $region7: #{tpu_custom_call.1} parent=1 // loop_footer_branch
      %12 = sbr.rel target = $region3
    $region8: #{tpu_custom_call.1} parent=1 // loop_exit
      _
    %2295 = vsyncpa [#allocation3], 1
    %s2296 = scalar_lea.sflag [#allocation3], 1
    %2297 = vsyncpa %s2296, 1
    %2298 = vsyncpa [#allocation4], 1
    %s2299 = scalar_lea.sflag [#allocation4], 1
    %2300 = vsyncpa %s2299, 1

</llo_original>
